<compile_context>
chip_gen: v5e
topology: v5e:2x2
jax: 0.10.0
libtpu: 0.0.40
codegen_flags: <defaults>
</compile_context>

<pallas_src>
import jax
import jax.numpy as jnp
from jax import lax
from jax.experimental import pallas as pl
from jax.experimental.pallas import tpu as pltpu

NUM_HEADS = 8  # fixed by the module: nn.MultiheadAttention(embed_size, 8)


def _linear_bf16(x_f32, w_ref, b_ref):
    """y = x @ W + b with bf16 MXU operands and f32 accumulation."""
    return jnp.dot(x_f32.astype(jnp.bfloat16),
                   w_ref[...].astype(jnp.bfloat16),
                   preferred_element_type=jnp.float32) + b_ref[...]


def adversarial_body_kernel(
    last_ref, first_ref, segs_ref,
    wq_ref, bq_ref, wk_ref, bk_ref, wv_ref, bv_ref,
    wiq_ref, biq_ref, wik_ref, bik_ref, wiv_ref, biv_ref,
    wo_ref, bo_ref,
    hsent_ref, emean_ref,
):
    """One batch element per grid step: embed avg, segment masking, Q/K/V
    linears, 8-head attention (per-head lane slices), out-projection,
    seq-mean pooling.  Outputs H_sent [1,1,E] and mean(embed) [1,1,E]."""
    _, S, E = last_ref.shape
    dh = E // NUM_HEADS
    scale = 1.0 / (dh ** 0.5)

    last = last_ref[0]                       # (S, E)
    first = first_ref[0]                     # (S, E)
    embed = (last + first) * 0.5             # first_last_avg=True

    segs = segs_ref[0]                       # (S, 1) int32
    mask1 = (segs == 0).astype(jnp.float32)  # tar_mask_sent1
    mask2 = (segs == 1).astype(jnp.float32)  # tar_mask_sent2
    H1 = mask1 * embed                       # H_sent1
    H2 = mask2 * embed                       # H_sent2

    # outer projections self.K / self.V / self.Q
    K0 = _linear_bf16(H1, wk_ref, bk_ref)
    V0 = _linear_bf16(H1, wv_ref, bv_ref)
    Q0 = _linear_bf16(H2, wq_ref, bq_ref)

    # nn.MultiheadAttention in-projection; cast once to bf16 for the head matmuls
    q = _linear_bf16(Q0, wiq_ref, biq_ref).astype(jnp.bfloat16)
    k = _linear_bf16(K0, wik_ref, bik_ref).astype(jnp.bfloat16)
    v = _linear_bf16(V0, wiv_ref, biv_ref).astype(jnp.bfloat16)

    # standard per-head attention with static lane slices (lane-aligned when
    # E is a multiple of 1024, i.e. dh multiple of 128, at production sizes)
    head_outs = []
    for h in range(NUM_HEADS):
        sl = slice(h * dh, (h + 1) * dh)
        qh = q[:, sl]                        # (S, dh) bf16
        kh = k[:, sl]
        vh = v[:, sl]
        # q . k^T via contraction on the last dims (no materialized transpose)
        scores = lax.dot_general(qh, kh, (((1,), (1,)), ((), ())),
                                 preferred_element_type=jnp.float32) * scale
        m = jnp.max(scores, axis=-1, keepdims=True)
        e = jnp.exp(scores - m)
        p = e * pl.reciprocal(jnp.sum(e, axis=-1, keepdims=True), approx=True)
        head_outs.append(jnp.dot(p.astype(jnp.bfloat16), vh,
                                 preferred_element_type=jnp.float32))
    attn_concat = jnp.concatenate(head_outs, axis=-1)      # (S, E)

    att_out = jnp.dot(attn_concat.astype(jnp.bfloat16),
                      wo_ref[...].astype(jnp.bfloat16),
                      preferred_element_type=jnp.float32) + bo_ref[...]

    # full-block, lane-dense per-b writes
    hsent_ref[...] = jnp.mean(att_out, axis=0, keepdims=True).reshape(1, 1, E)
    emean_ref[...] = jnp.mean(embed, axis=0, keepdims=True).reshape(1, 1, E)


@jax.jit
def adversarial_net_forward(last, first, segs, params):
    """Training-mode forward: returns (predictions, predictions_adv, task_prediction)."""
    B, S, E = last.shape

    act_spec = pl.BlockSpec((1, S, E), lambda b: (b, 0, 0))
    seg_spec = pl.BlockSpec((1, S, 1), lambda b: (b, 0, 0))
    w_spec = pl.BlockSpec((E, E), lambda b: (0, 0))   # resident across the grid
    b_spec = pl.BlockSpec((1, E), lambda b: (0, 0))   # resident across the grid
    out_spec = pl.BlockSpec((1, 1, E), lambda b: (b, 0, 0))

    body = pl.pallas_call(
        adversarial_body_kernel,
        out_shape=(jax.ShapeDtypeStruct((B, 1, E), jnp.float32),
                   jax.ShapeDtypeStruct((B, 1, E), jnp.float32)),
        grid_spec=pltpu.PrefetchScalarGridSpec(
            num_scalar_prefetch=0,
            grid=(B,),
            in_specs=[act_spec, act_spec, seg_spec] + [w_spec, b_spec] * 7,
            out_specs=[out_spec, out_spec],
        ),
        compiler_params=pltpu.CompilerParams(
            dimension_semantics=("parallel",),          # megacore on v7x
            vmem_limit_bytes=32 * 1024 * 1024,
        ),
    )
    hsent, emean = body(
        last, first, segs.reshape(B, S, 1).astype(jnp.int32),
        params["wq"], params["bq"], params["wk"], params["bk"],
        params["wv"], params["bv"],
        params["wiq"], params["biq"], params["wik"], params["bik"],
        params["wiv"], params["biv"],
        params["wo"], params["bo"],
    )
    hsent = hsent.reshape(B, E)
    emean = emean.reshape(B, E)

    # Tiny classification heads (O(B*E*C), C in {2,3,4}): fused into plain XLA
    # on the kernel outputs instead of a second pallas_call (per perf review).
    Bh = B // 2
    predictions = hsent[:Bh, :] @ params["wcls"] + params["bcls"]
    predictions_adv = hsent[Bh:, :] @ params["wadv"] + params["badv"]
    # GRLayer is identity in the forward pass
    task_prediction = emean @ params["wtask"] + params["btask"]
    return predictions, predictions_adv, task_prediction


def init_params(key, E, num_classes, num_classes_adv, std=0.02):
    """Synthetic init mirroring _init_weights: normal(0, 0.02) weights, zero
    biases.  Weights stored pre-transposed as [in, out]."""
    ks = jax.random.split(key, 12)

    def w(k, fin, fout):
        return jax.random.normal(k, (fin, fout), jnp.float32) * std

    def b(fout):
        return jnp.zeros((1, fout), jnp.float32)

    return dict(
        # self.Q / self.K / self.V
        wq=w(ks[0], E, E), bq=b(E),
        wk=w(ks[1], E, E), bk=b(E),
        wv=w(ks[2], E, E), bv=b(E),
        # nn.MultiheadAttention in_proj (q/k/v chunks) and out_proj
        wiq=w(ks[3], E, E), biq=b(E),
        wik=w(ks[4], E, E), bik=b(E),
        wiv=w(ks[5], E, E), biv=b(E),
        wo=w(ks[6], E, E), bo=b(E),
        # classification heads
        wcls=w(ks[7], E, num_classes), bcls=b(num_classes),
        wadv=w(ks[8], E, num_classes_adv), badv=b(num_classes_adv),
        wtask=w(ks[9], E, 2), btask=b(2),
    )


if __name__ == "__main__":
    B, S, E = 2, 8, 32            # embed_size=32 → head_dim=4 with 8 heads
    num_classes, num_classes_adv = 3, 4

    key = jax.random.PRNGKey(0)
    k_last, k_first, k_seg, k_par = jax.random.split(key, 4)

    last_sent1 = jax.random.normal(k_last, (B, S, E), jnp.float32)    # hidden_states[-1]
    first_sent1 = jax.random.normal(k_first, (B, S, E), jnp.float32)  # hidden_states[1]
    segs_sent1 = (jax.random.uniform(k_seg, (B, S)) < 0.5).astype(jnp.int32)  # {0,1}

    params = init_params(k_par, E, num_classes, num_classes_adv)

    preds, preds_adv, task_pred = adversarial_net_forward(
        last_sent1, first_sent1, segs_sent1, params)
    jax.block_until_ready((preds, preds_adv, task_pred))

    assert preds.shape == (B // 2, num_classes)
    assert preds_adv.shape == (B - B // 2, num_classes_adv)
    assert task_pred.shape == (B, 2)
    print("KERNEL_OK")
</pallas_src>

<mosaic_0001>
module attributes {stable_mosaic.version = 11 : i64} {
  func.func @adversarial_body_kernel(%arg0: i32, %arg1: memref<1x8x32xf32, #tpu.memory_space<vmem>>, %arg2: memref<1x8x32xf32, #tpu.memory_space<vmem>>, %arg3: memref<1x8x1xi32, #tpu.memory_space<vmem>>, %arg4: memref<32x32xf32, #tpu.memory_space<vmem>>, %arg5: memref<1x32xf32, #tpu.memory_space<vmem>>, %arg6: memref<32x32xf32, #tpu.memory_space<vmem>>, %arg7: memref<1x32xf32, #tpu.memory_space<vmem>>, %arg8: memref<32x32xf32, #tpu.memory_space<vmem>>, %arg9: memref<1x32xf32, #tpu.memory_space<vmem>>, %arg10: memref<32x32xf32, #tpu.memory_space<vmem>>, %arg11: memref<1x32xf32, #tpu.memory_space<vmem>>, %arg12: memref<32x32xf32, #tpu.memory_space<vmem>>, %arg13: memref<1x32xf32, #tpu.memory_space<vmem>>, %arg14: memref<32x32xf32, #tpu.memory_space<vmem>>, %arg15: memref<1x32xf32, #tpu.memory_space<vmem>>, %arg16: memref<32x32xf32, #tpu.memory_space<vmem>>, %arg17: memref<1x32xf32, #tpu.memory_space<vmem>>, %arg18: memref<1x1x32xf32, #tpu.memory_space<vmem>>, %arg19: memref<1x1x32xf32, #tpu.memory_space<vmem>>) attributes {dimension_semantics = [#tpu.dimension_semantics<parallel>], iteration_bounds = array<i64: 2>, scalar_prefetch = 0 : i64, scratch_operands = 0 : i64, tpu.core_type = #tpu.core_type<tc>, window_params = [{transform_indices = @transform_0, window_bounds = array<i64: 1, 8, 32>}, {transform_indices = @transform_1, window_bounds = array<i64: 1, 8, 32>}, {transform_indices = @transform_2, window_bounds = array<i64: 1, 8, 1>}, {pipeline_mode = #tpu.pipeline_mode<synchronous>, transform_indices = @transform_3, window_bounds = array<i64: 32, 32>}, {pipeline_mode = #tpu.pipeline_mode<synchronous>, transform_indices = @transform_4, window_bounds = array<i64: 1, 32>}, {pipeline_mode = #tpu.pipeline_mode<synchronous>, transform_indices = @transform_5, window_bounds = array<i64: 32, 32>}, {pipeline_mode = #tpu.pipeline_mode<synchronous>, transform_indices = @transform_6, window_bounds = array<i64: 1, 32>}, {pipeline_mode = #tpu.pipeline_mode<synchronous>, transform_indices = @transform_7, window_bounds = array<i64: 32, 32>}, {pipeline_mode = #tpu.pipeline_mode<synchronous>, transform_indices = @transform_8, window_bounds = array<i64: 1, 32>}, {pipeline_mode = #tpu.pipeline_mode<synchronous>, transform_indices = @transform_9, window_bounds = array<i64: 32, 32>}, {pipeline_mode = #tpu.pipeline_mode<synchronous>, transform_indices = @transform_10, window_bounds = array<i64: 1, 32>}, {pipeline_mode = #tpu.pipeline_mode<synchronous>, transform_indices = @transform_11, window_bounds = array<i64: 32, 32>}, {pipeline_mode = #tpu.pipeline_mode<synchronous>, transform_indices = @transform_12, window_bounds = array<i64: 1, 32>}, {pipeline_mode = #tpu.pipeline_mode<synchronous>, transform_indices = @transform_13, window_bounds = array<i64: 32, 32>}, {pipeline_mode = #tpu.pipeline_mode<synchronous>, transform_indices = @transform_14, window_bounds = array<i64: 1, 32>}, {pipeline_mode = #tpu.pipeline_mode<synchronous>, transform_indices = @transform_15, window_bounds = array<i64: 32, 32>}, {pipeline_mode = #tpu.pipeline_mode<synchronous>, transform_indices = @transform_16, window_bounds = array<i64: 1, 32>}, {transform_indices = @transform_17, window_bounds = array<i64: 1, 1, 32>}, {transform_indices = @transform_18, window_bounds = array<i64: 1, 1, 32>}]} {
    %c0 = arith.constant 0 : index
    %c0_0 = arith.constant 0 : index
    %c0_1 = arith.constant 0 : index
    %0 = vector.load %arg1[%c0, %c0_0, %c0_1] : memref<1x8x32xf32, #tpu.memory_space<vmem>>, vector<1x8x32xf32>
    %1 = vector.shape_cast %0 : vector<1x8x32xf32> to vector<8x32xf32>
    %c0_2 = arith.constant 0 : index
    %c0_3 = arith.constant 0 : index
    %c0_4 = arith.constant 0 : index
    %2 = vector.load %arg2[%c0_2, %c0_3, %c0_4] : memref<1x8x32xf32, #tpu.memory_space<vmem>>, vector<1x8x32xf32>
    %3 = vector.shape_cast %2 : vector<1x8x32xf32> to vector<8x32xf32>
    %4 = arith.addf %1, %3 : vector<8x32xf32>
    %cst = arith.constant 5.000000e-01 : f32
    %5 = vector.broadcast %cst : f32 to vector<8x32xf32>
    %6 = arith.mulf %4, %5 : vector<8x32xf32>
    %c0_5 = arith.constant 0 : index
    %c0_6 = arith.constant 0 : index
    %c0_7 = arith.constant 0 : index
    %7 = vector.load %arg3[%c0_5, %c0_6, %c0_7] : memref<1x8x1xi32, #tpu.memory_space<vmem>>, vector<1x8x1xi32>
    %8 = vector.shape_cast %7 : vector<1x8x1xi32> to vector<8x1xi32>
    %c0_i32 = arith.constant 0 : i32
    %9 = vector.broadcast %c0_i32 : i32 to vector<8x1xi32>
    %10 = arith.cmpi eq, %8, %9 : vector<8x1xi32>
    %11 = arith.extui %10 : vector<8x1xi1> to vector<8x1xi32>
    %12 = arith.sitofp %11 : vector<8x1xi32> to vector<8x1xf32>
    %c1_i32 = arith.constant 1 : i32
    %13 = vector.broadcast %c1_i32 : i32 to vector<8x1xi32>
    %14 = arith.cmpi eq, %8, %13 : vector<8x1xi32>
    %15 = arith.extui %14 : vector<8x1xi1> to vector<8x1xi32>
    %16 = arith.sitofp %15 : vector<8x1xi32> to vector<8x1xf32>
    %17 = vector.broadcast %12 : vector<8x1xf32> to vector<8x32xf32>
    %18 = arith.mulf %17, %6 : vector<8x32xf32>
    %19 = vector.broadcast %16 : vector<8x1xf32> to vector<8x32xf32>
    %20 = arith.mulf %19, %6 : vector<8x32xf32>
    %21 = arith.truncf %18 : vector<8x32xf32> to vector<8x32xbf16>
    %c0_8 = arith.constant 0 : index
    %c0_9 = arith.constant 0 : index
    %22 = vector.load %arg6[%c0_8, %c0_9] : memref<32x32xf32, #tpu.memory_space<vmem>>, vector<32x32xf32>
    %23 = arith.truncf %22 : vector<32x32xf32> to vector<32x32xbf16>
    %cst_10 = arith.constant dense<0.000000e+00> : vector<8x32xf32>
    %24 = tpu.matmul %21, %23, %cst_10 {dimension_numbers = #tpu.dot_dimension_numbers<[1], [0], [0], [1], [0, 0, 1, 1], [], []>} : vector<8x32xbf16>, vector<32x32xbf16>, vector<8x32xf32> -> vector<8x32xf32>
    %c0_11 = arith.constant 0 : index
    %c0_12 = arith.constant 0 : index
    %25 = vector.load %arg7[%c0_11, %c0_12] : memref<1x32xf32, #tpu.memory_space<vmem>>, vector<1x32xf32>
    %26 = vector.broadcast %25 : vector<1x32xf32> to vector<8x32xf32>
    %27 = arith.addf %24, %26 : vector<8x32xf32>
    %28 = arith.truncf %18 : vector<8x32xf32> to vector<8x32xbf16>
    %c0_13 = arith.constant 0 : index
    %c0_14 = arith.constant 0 : index
    %29 = vector.load %arg8[%c0_13, %c0_14] : memref<32x32xf32, #tpu.memory_space<vmem>>, vector<32x32xf32>
    %30 = arith.truncf %29 : vector<32x32xf32> to vector<32x32xbf16>
    %cst_15 = arith.constant dense<0.000000e+00> : vector<8x32xf32>
    %31 = tpu.matmul %28, %30, %cst_15 {dimension_numbers = #tpu.dot_dimension_numbers<[1], [0], [0], [1], [0, 0, 1, 1], [], []>} : vector<8x32xbf16>, vector<32x32xbf16>, vector<8x32xf32> -> vector<8x32xf32>
    %c0_16 = arith.constant 0 : index
    %c0_17 = arith.constant 0 : index
    %32 = vector.load %arg9[%c0_16, %c0_17] : memref<1x32xf32, #tpu.memory_space<vmem>>, vector<1x32xf32>
    %33 = vector.broadcast %32 : vector<1x32xf32> to vector<8x32xf32>
    %34 = arith.addf %31, %33 : vector<8x32xf32>
    %35 = arith.truncf %20 : vector<8x32xf32> to vector<8x32xbf16>
    %c0_18 = arith.constant 0 : index
    %c0_19 = arith.constant 0 : index
    %36 = vector.load %arg4[%c0_18, %c0_19] : memref<32x32xf32, #tpu.memory_space<vmem>>, vector<32x32xf32>
    %37 = arith.truncf %36 : vector<32x32xf32> to vector<32x32xbf16>
    %cst_20 = arith.constant dense<0.000000e+00> : vector<8x32xf32>
    %38 = tpu.matmul %35, %37, %cst_20 {dimension_numbers = #tpu.dot_dimension_numbers<[1], [0], [0], [1], [0, 0, 1, 1], [], []>} : vector<8x32xbf16>, vector<32x32xbf16>, vector<8x32xf32> -> vector<8x32xf32>
    %c0_21 = arith.constant 0 : index
    %c0_22 = arith.constant 0 : index
    %39 = vector.load %arg5[%c0_21, %c0_22] : memref<1x32xf32, #tpu.memory_space<vmem>>, vector<1x32xf32>
    %40 = vector.broadcast %39 : vector<1x32xf32> to vector<8x32xf32>
    %41 = arith.addf %38, %40 : vector<8x32xf32>
    %42 = arith.truncf %41 : vector<8x32xf32> to vector<8x32xbf16>
    %c0_23 = arith.constant 0 : index
    %c0_24 = arith.constant 0 : index
    %43 = vector.load %arg10[%c0_23, %c0_24] : memref<32x32xf32, #tpu.memory_space<vmem>>, vector<32x32xf32>
    %44 = arith.truncf %43 : vector<32x32xf32> to vector<32x32xbf16>
    %cst_25 = arith.constant dense<0.000000e+00> : vector<8x32xf32>
    %45 = tpu.matmul %42, %44, %cst_25 {dimension_numbers = #tpu.dot_dimension_numbers<[1], [0], [0], [1], [0, 0, 1, 1], [], []>} : vector<8x32xbf16>, vector<32x32xbf16>, vector<8x32xf32> -> vector<8x32xf32>
    %c0_26 = arith.constant 0 : index
    %c0_27 = arith.constant 0 : index
    %46 = vector.load %arg11[%c0_26, %c0_27] : memref<1x32xf32, #tpu.memory_space<vmem>>, vector<1x32xf32>
    %47 = vector.broadcast %46 : vector<1x32xf32> to vector<8x32xf32>
    %48 = arith.addf %45, %47 : vector<8x32xf32>
    %49 = arith.truncf %48 : vector<8x32xf32> to vector<8x32xbf16>
    %50 = arith.truncf %27 : vector<8x32xf32> to vector<8x32xbf16>
    %c0_28 = arith.constant 0 : index
    %c0_29 = arith.constant 0 : index
    %51 = vector.load %arg12[%c0_28, %c0_29] : memref<32x32xf32, #tpu.memory_space<vmem>>, vector<32x32xf32>
    %52 = arith.truncf %51 : vector<32x32xf32> to vector<32x32xbf16>
    %cst_30 = arith.constant dense<0.000000e+00> : vector<8x32xf32>
    %53 = tpu.matmul %50, %52, %cst_30 {dimension_numbers = #tpu.dot_dimension_numbers<[1], [0], [0], [1], [0, 0, 1, 1], [], []>} : vector<8x32xbf16>, vector<32x32xbf16>, vector<8x32xf32> -> vector<8x32xf32>
    %c0_31 = arith.constant 0 : index
    %c0_32 = arith.constant 0 : index
    %54 = vector.load %arg13[%c0_31, %c0_32] : memref<1x32xf32, #tpu.memory_space<vmem>>, vector<1x32xf32>
    %55 = vector.broadcast %54 : vector<1x32xf32> to vector<8x32xf32>
    %56 = arith.addf %53, %55 : vector<8x32xf32>
    %57 = arith.truncf %56 : vector<8x32xf32> to vector<8x32xbf16>
    %58 = arith.truncf %34 : vector<8x32xf32> to vector<8x32xbf16>
    %c0_33 = arith.constant 0 : index
    %c0_34 = arith.constant 0 : index
    %59 = vector.load %arg14[%c0_33, %c0_34] : memref<32x32xf32, #tpu.memory_space<vmem>>, vector<32x32xf32>
    %60 = arith.truncf %59 : vector<32x32xf32> to vector<32x32xbf16>
    %cst_35 = arith.constant dense<0.000000e+00> : vector<8x32xf32>
    %61 = tpu.matmul %58, %60, %cst_35 {dimension_numbers = #tpu.dot_dimension_numbers<[1], [0], [0], [1], [0, 0, 1, 1], [], []>} : vector<8x32xbf16>, vector<32x32xbf16>, vector<8x32xf32> -> vector<8x32xf32>
    %c0_36 = arith.constant 0 : index
    %c0_37 = arith.constant 0 : index
    %62 = vector.load %arg15[%c0_36, %c0_37] : memref<1x32xf32, #tpu.memory_space<vmem>>, vector<1x32xf32>
    %63 = vector.broadcast %62 : vector<1x32xf32> to vector<8x32xf32>
    %64 = arith.addf %61, %63 : vector<8x32xf32>
    %65 = arith.truncf %64 : vector<8x32xf32> to vector<8x32xbf16>
    %66 = vector.extract_strided_slice %49 {offsets = [0, 0], sizes = [8, 4], strides = [1, 1]} : vector<8x32xbf16> to vector<8x4xbf16>
    %67 = vector.extract_strided_slice %57 {offsets = [0, 0], sizes = [8, 4], strides = [1, 1]} : vector<8x32xbf16> to vector<8x4xbf16>
    %68 = vector.extract_strided_slice %65 {offsets = [0, 0], sizes = [8, 4], strides = [1, 1]} : vector<8x32xbf16> to vector<8x4xbf16>
    %cst_38 = arith.constant dense<0.000000e+00> : vector<8x8xf32>
    %69 = tpu.matmul %66, %67, %cst_38 {dimension_numbers = #tpu.dot_dimension_numbers<[1], [1], [0], [0], [0, 0, 1, 0], [], []>} : vector<8x4xbf16>, vector<8x4xbf16>, vector<8x8xf32> -> vector<8x8xf32>
    %cst_39 = arith.constant 5.000000e-01 : f32
    %70 = vector.broadcast %cst_39 : f32 to vector<8x8xf32>
    %71 = arith.mulf %69, %70 : vector<8x8xf32>
    %cst_40 = arith.constant dense<0xFF800000> : vector<8xf32>
    %72 = vector.multi_reduction <maximumf>, %71, %cst_40 [1] : vector<8x8xf32> to vector<8xf32>
    %73 = vector.shape_cast %72 : vector<8xf32> to vector<8x1xf32>
    %74 = vector.broadcast %73 : vector<8x1xf32> to vector<8x8xf32>
    %75 = arith.subf %71, %74 : vector<8x8xf32>
    %76 = math.exp %75 : vector<8x8xf32>
    %cst_41 = arith.constant dense<0.000000e+00> : vector<8xf32>
    %77 = vector.multi_reduction <add>, %76, %cst_41 [1] : vector<8x8xf32> to vector<8xf32>
    %78 = vector.shape_cast %77 : vector<8xf32> to vector<8x1xf32>
    %79 = tpu.reciprocal %78 {approx = true} : vector<8x1xf32> -> vector<8x1xf32>
    %80 = vector.broadcast %79 : vector<8x1xf32> to vector<8x8xf32>
    %81 = arith.mulf %76, %80 : vector<8x8xf32>
    %82 = arith.truncf %81 : vector<8x8xf32> to vector<8x8xbf16>
    %cst_42 = arith.constant dense<0.000000e+00> : vector<8x4xf32>
    %83 = tpu.matmul %82, %68, %cst_42 {dimension_numbers = #tpu.dot_dimension_numbers<[1], [0], [0], [1], [0, 0, 1, 1], [], []>} : vector<8x8xbf16>, vector<8x4xbf16>, vector<8x4xf32> -> vector<8x4xf32>
    %84 = vector.extract_strided_slice %49 {offsets = [0, 4], sizes = [8, 4], strides = [1, 1]} : vector<8x32xbf16> to vector<8x4xbf16>
    %85 = vector.extract_strided_slice %57 {offsets = [0, 4], sizes = [8, 4], strides = [1, 1]} : vector<8x32xbf16> to vector<8x4xbf16>
    %86 = vector.extract_strided_slice %65 {offsets = [0, 4], sizes = [8, 4], strides = [1, 1]} : vector<8x32xbf16> to vector<8x4xbf16>
    %cst_43 = arith.constant dense<0.000000e+00> : vector<8x8xf32>
    %87 = tpu.matmul %84, %85, %cst_43 {dimension_numbers = #tpu.dot_dimension_numbers<[1], [1], [0], [0], [0, 0, 1, 0], [], []>} : vector<8x4xbf16>, vector<8x4xbf16>, vector<8x8xf32> -> vector<8x8xf32>
    %cst_44 = arith.constant 5.000000e-01 : f32
    %88 = vector.broadcast %cst_44 : f32 to vector<8x8xf32>
    %89 = arith.mulf %87, %88 : vector<8x8xf32>
    %cst_45 = arith.constant dense<0xFF800000> : vector<8xf32>
    %90 = vector.multi_reduction <maximumf>, %89, %cst_45 [1] : vector<8x8xf32> to vector<8xf32>
    %91 = vector.shape_cast %90 : vector<8xf32> to vector<8x1xf32>
    %92 = vector.broadcast %91 : vector<8x1xf32> to vector<8x8xf32>
    %93 = arith.subf %89, %92 : vector<8x8xf32>
    %94 = math.exp %93 : vector<8x8xf32>
    %cst_46 = arith.constant dense<0.000000e+00> : vector<8xf32>
    %95 = vector.multi_reduction <add>, %94, %cst_46 [1] : vector<8x8xf32> to vector<8xf32>
    %96 = vector.shape_cast %95 : vector<8xf32> to vector<8x1xf32>
    %97 = tpu.reciprocal %96 {approx = true} : vector<8x1xf32> -> vector<8x1xf32>
    %98 = vector.broadcast %97 : vector<8x1xf32> to vector<8x8xf32>
    %99 = arith.mulf %94, %98 : vector<8x8xf32>
    %100 = arith.truncf %99 : vector<8x8xf32> to vector<8x8xbf16>
    %cst_47 = arith.constant dense<0.000000e+00> : vector<8x4xf32>
    %101 = tpu.matmul %100, %86, %cst_47 {dimension_numbers = #tpu.dot_dimension_numbers<[1], [0], [0], [1], [0, 0, 1, 1], [], []>} : vector<8x8xbf16>, vector<8x4xbf16>, vector<8x4xf32> -> vector<8x4xf32>
    %102 = vector.extract_strided_slice %49 {offsets = [0, 8], sizes = [8, 4], strides = [1, 1]} : vector<8x32xbf16> to vector<8x4xbf16>
    %103 = vector.extract_strided_slice %57 {offsets = [0, 8], sizes = [8, 4], strides = [1, 1]} : vector<8x32xbf16> to vector<8x4xbf16>
    %104 = vector.extract_strided_slice %65 {offsets = [0, 8], sizes = [8, 4], strides = [1, 1]} : vector<8x32xbf16> to vector<8x4xbf16>
    %cst_48 = arith.constant dense<0.000000e+00> : vector<8x8xf32>
    %105 = tpu.matmul %102, %103, %cst_48 {dimension_numbers = #tpu.dot_dimension_numbers<[1], [1], [0], [0], [0, 0, 1, 0], [], []>} : vector<8x4xbf16>, vector<8x4xbf16>, vector<8x8xf32> -> vector<8x8xf32>
    %cst_49 = arith.constant 5.000000e-01 : f32
    %106 = vector.broadcast %cst_49 : f32 to vector<8x8xf32>
    %107 = arith.mulf %105, %106 : vector<8x8xf32>
    %cst_50 = arith.constant dense<0xFF800000> : vector<8xf32>
    %108 = vector.multi_reduction <maximumf>, %107, %cst_50 [1] : vector<8x8xf32> to vector<8xf32>
    %109 = vector.shape_cast %108 : vector<8xf32> to vector<8x1xf32>
    %110 = vector.broadcast %109 : vector<8x1xf32> to vector<8x8xf32>
    %111 = arith.subf %107, %110 : vector<8x8xf32>
    %112 = math.exp %111 : vector<8x8xf32>
    %cst_51 = arith.constant dense<0.000000e+00> : vector<8xf32>
    %113 = vector.multi_reduction <add>, %112, %cst_51 [1] : vector<8x8xf32> to vector<8xf32>
    %114 = vector.shape_cast %113 : vector<8xf32> to vector<8x1xf32>
    %115 = tpu.reciprocal %114 {approx = true} : vector<8x1xf32> -> vector<8x1xf32>
    %116 = vector.broadcast %115 : vector<8x1xf32> to vector<8x8xf32>
    %117 = arith.mulf %112, %116 : vector<8x8xf32>
    %118 = arith.truncf %117 : vector<8x8xf32> to vector<8x8xbf16>
    %cst_52 = arith.constant dense<0.000000e+00> : vector<8x4xf32>
    %119 = tpu.matmul %118, %104, %cst_52 {dimension_numbers = #tpu.dot_dimension_numbers<[1], [0], [0], [1], [0, 0, 1, 1], [], []>} : vector<8x8xbf16>, vector<8x4xbf16>, vector<8x4xf32> -> vector<8x4xf32>
    %120 = vector.extract_strided_slice %49 {offsets = [0, 12], sizes = [8, 4], strides = [1, 1]} : vector<8x32xbf16> to vector<8x4xbf16>
    %121 = vector.extract_strided_slice %57 {offsets = [0, 12], sizes = [8, 4], strides = [1, 1]} : vector<8x32xbf16> to vector<8x4xbf16>
    %122 = vector.extract_strided_slice %65 {offsets = [0, 12], sizes = [8, 4], strides = [1, 1]} : vector<8x32xbf16> to vector<8x4xbf16>
    %cst_53 = arith.constant dense<0.000000e+00> : vector<8x8xf32>
    %123 = tpu.matmul %120, %121, %cst_53 {dimension_numbers = #tpu.dot_dimension_numbers<[1], [1], [0], [0], [0, 0, 1, 0], [], []>} : vector<8x4xbf16>, vector<8x4xbf16>, vector<8x8xf32> -> vector<8x8xf32>
    %cst_54 = arith.constant 5.000000e-01 : f32
    %124 = vector.broadcast %cst_54 : f32 to vector<8x8xf32>
    %125 = arith.mulf %123, %124 : vector<8x8xf32>
    %cst_55 = arith.constant dense<0xFF800000> : vector<8xf32>
    %126 = vector.multi_reduction <maximumf>, %125, %cst_55 [1] : vector<8x8xf32> to vector<8xf32>
    %127 = vector.shape_cast %126 : vector<8xf32> to vector<8x1xf32>
    %128 = vector.broadcast %127 : vector<8x1xf32> to vector<8x8xf32>
    %129 = arith.subf %125, %128 : vector<8x8xf32>
    %130 = math.exp %129 : vector<8x8xf32>
    %cst_56 = arith.constant dense<0.000000e+00> : vector<8xf32>
    %131 = vector.multi_reduction <add>, %130, %cst_56 [1] : vector<8x8xf32> to vector<8xf32>
    %132 = vector.shape_cast %131 : vector<8xf32> to vector<8x1xf32>
    %133 = tpu.reciprocal %132 {approx = true} : vector<8x1xf32> -> vector<8x1xf32>
    %134 = vector.broadcast %133 : vector<8x1xf32> to vector<8x8xf32>
    %135 = arith.mulf %130, %134 : vector<8x8xf32>
    %136 = arith.truncf %135 : vector<8x8xf32> to vector<8x8xbf16>
    %cst_57 = arith.constant dense<0.000000e+00> : vector<8x4xf32>
    %137 = tpu.matmul %136, %122, %cst_57 {dimension_numbers = #tpu.dot_dimension_numbers<[1], [0], [0], [1], [0, 0, 1, 1], [], []>} : vector<8x8xbf16>, vector<8x4xbf16>, vector<8x4xf32> -> vector<8x4xf32>
    %138 = vector.extract_strided_slice %49 {offsets = [0, 16], sizes = [8, 4], strides = [1, 1]} : vector<8x32xbf16> to vector<8x4xbf16>
    %139 = vector.extract_strided_slice %57 {offsets = [0, 16], sizes = [8, 4], strides = [1, 1]} : vector<8x32xbf16> to vector<8x4xbf16>
    %140 = vector.extract_strided_slice %65 {offsets = [0, 16], sizes = [8, 4], strides = [1, 1]} : vector<8x32xbf16> to vector<8x4xbf16>
    %cst_58 = arith.constant dense<0.000000e+00> : vector<8x8xf32>
    %141 = tpu.matmul %138, %139, %cst_58 {dimension_numbers = #tpu.dot_dimension_numbers<[1], [1], [0], [0], [0, 0, 1, 0], [], []>} : vector<8x4xbf16>, vector<8x4xbf16>, vector<8x8xf32> -> vector<8x8xf32>
    %cst_59 = arith.constant 5.000000e-01 : f32
    %142 = vector.broadcast %cst_59 : f32 to vector<8x8xf32>
    %143 = arith.mulf %141, %142 : vector<8x8xf32>
    %cst_60 = arith.constant dense<0xFF800000> : vector<8xf32>
    %144 = vector.multi_reduction <maximumf>, %143, %cst_60 [1] : vector<8x8xf32> to vector<8xf32>
    %145 = vector.shape_cast %144 : vector<8xf32> to vector<8x1xf32>
    %146 = vector.broadcast %145 : vector<8x1xf32> to vector<8x8xf32>
    %147 = arith.subf %143, %146 : vector<8x8xf32>
    %148 = math.exp %147 : vector<8x8xf32>
    %cst_61 = arith.constant dense<0.000000e+00> : vector<8xf32>
    %149 = vector.multi_reduction <add>, %148, %cst_61 [1] : vector<8x8xf32> to vector<8xf32>
    %150 = vector.shape_cast %149 : vector<8xf32> to vector<8x1xf32>
    %151 = tpu.reciprocal %150 {approx = true} : vector<8x1xf32> -> vector<8x1xf32>
    %152 = vector.broadcast %151 : vector<8x1xf32> to vector<8x8xf32>
    %153 = arith.mulf %148, %152 : vector<8x8xf32>
    %154 = arith.truncf %153 : vector<8x8xf32> to vector<8x8xbf16>
    %cst_62 = arith.constant dense<0.000000e+00> : vector<8x4xf32>
    %155 = tpu.matmul %154, %140, %cst_62 {dimension_numbers = #tpu.dot_dimension_numbers<[1], [0], [0], [1], [0, 0, 1, 1], [], []>} : vector<8x8xbf16>, vector<8x4xbf16>, vector<8x4xf32> -> vector<8x4xf32>
    %156 = vector.extract_strided_slice %49 {offsets = [0, 20], sizes = [8, 4], strides = [1, 1]} : vector<8x32xbf16> to vector<8x4xbf16>
    %157 = vector.extract_strided_slice %57 {offsets = [0, 20], sizes = [8, 4], strides = [1, 1]} : vector<8x32xbf16> to vector<8x4xbf16>
    %158 = vector.extract_strided_slice %65 {offsets = [0, 20], sizes = [8, 4], strides = [1, 1]} : vector<8x32xbf16> to vector<8x4xbf16>
    %cst_63 = arith.constant dense<0.000000e+00> : vector<8x8xf32>
    %159 = tpu.matmul %156, %157, %cst_63 {dimension_numbers = #tpu.dot_dimension_numbers<[1], [1], [0], [0], [0, 0, 1, 0], [], []>} : vector<8x4xbf16>, vector<8x4xbf16>, vector<8x8xf32> -> vector<8x8xf32>
    %cst_64 = arith.constant 5.000000e-01 : f32
    %160 = vector.broadcast %cst_64 : f32 to vector<8x8xf32>
    %161 = arith.mulf %159, %160 : vector<8x8xf32>
    %cst_65 = arith.constant dense<0xFF800000> : vector<8xf32>
    %162 = vector.multi_reduction <maximumf>, %161, %cst_65 [1] : vector<8x8xf32> to vector<8xf32>
    %163 = vector.shape_cast %162 : vector<8xf32> to vector<8x1xf32>
    %164 = vector.broadcast %163 : vector<8x1xf32> to vector<8x8xf32>
    %165 = arith.subf %161, %164 : vector<8x8xf32>
    %166 = math.exp %165 : vector<8x8xf32>
    %cst_66 = arith.constant dense<0.000000e+00> : vector<8xf32>
    %167 = vector.multi_reduction <add>, %166, %cst_66 [1] : vector<8x8xf32> to vector<8xf32>
    %168 = vector.shape_cast %167 : vector<8xf32> to vector<8x1xf32>
    %169 = tpu.reciprocal %168 {approx = true} : vector<8x1xf32> -> vector<8x1xf32>
    %170 = vector.broadcast %169 : vector<8x1xf32> to vector<8x8xf32>
    %171 = arith.mulf %166, %170 : vector<8x8xf32>
    %172 = arith.truncf %171 : vector<8x8xf32> to vector<8x8xbf16>
    %cst_67 = arith.constant dense<0.000000e+00> : vector<8x4xf32>
    %173 = tpu.matmul %172, %158, %cst_67 {dimension_numbers = #tpu.dot_dimension_numbers<[1], [0], [0], [1], [0, 0, 1, 1], [], []>} : vector<8x8xbf16>, vector<8x4xbf16>, vector<8x4xf32> -> vector<8x4xf32>
    %174 = vector.extract_strided_slice %49 {offsets = [0, 24], sizes = [8, 4], strides = [1, 1]} : vector<8x32xbf16> to vector<8x4xbf16>
    %175 = vector.extract_strided_slice %57 {offsets = [0, 24], sizes = [8, 4], strides = [1, 1]} : vector<8x32xbf16> to vector<8x4xbf16>
    %176 = vector.extract_strided_slice %65 {offsets = [0, 24], sizes = [8, 4], strides = [1, 1]} : vector<8x32xbf16> to vector<8x4xbf16>
    %cst_68 = arith.constant dense<0.000000e+00> : vector<8x8xf32>
    %177 = tpu.matmul %174, %175, %cst_68 {dimension_numbers = #tpu.dot_dimension_numbers<[1], [1], [0], [0], [0, 0, 1, 0], [], []>} : vector<8x4xbf16>, vector<8x4xbf16>, vector<8x8xf32> -> vector<8x8xf32>
    %cst_69 = arith.constant 5.000000e-01 : f32
    %178 = vector.broadcast %cst_69 : f32 to vector<8x8xf32>
    %179 = arith.mulf %177, %178 : vector<8x8xf32>
    %cst_70 = arith.constant dense<0xFF800000> : vector<8xf32>
    %180 = vector.multi_reduction <maximumf>, %179, %cst_70 [1] : vector<8x8xf32> to vector<8xf32>
    %181 = vector.shape_cast %180 : vector<8xf32> to vector<8x1xf32>
    %182 = vector.broadcast %181 : vector<8x1xf32> to vector<8x8xf32>
    %183 = arith.subf %179, %182 : vector<8x8xf32>
    %184 = math.exp %183 : vector<8x8xf32>
    %cst_71 = arith.constant dense<0.000000e+00> : vector<8xf32>
    %185 = vector.multi_reduction <add>, %184, %cst_71 [1] : vector<8x8xf32> to vector<8xf32>
    %186 = vector.shape_cast %185 : vector<8xf32> to vector<8x1xf32>
    %187 = tpu.reciprocal %186 {approx = true} : vector<8x1xf32> -> vector<8x1xf32>
    %188 = vector.broadcast %187 : vector<8x1xf32> to vector<8x8xf32>
    %189 = arith.mulf %184, %188 : vector<8x8xf32>
    %190 = arith.truncf %189 : vector<8x8xf32> to vector<8x8xbf16>
    %cst_72 = arith.constant dense<0.000000e+00> : vector<8x4xf32>
    %191 = tpu.matmul %190, %176, %cst_72 {dimension_numbers = #tpu.dot_dimension_numbers<[1], [0], [0], [1], [0, 0, 1, 1], [], []>} : vector<8x8xbf16>, vector<8x4xbf16>, vector<8x4xf32> -> vector<8x4xf32>
    %192 = vector.extract_strided_slice %49 {offsets = [0, 28], sizes = [8, 4], strides = [1, 1]} : vector<8x32xbf16> to vector<8x4xbf16>
    %193 = vector.extract_strided_slice %57 {offsets = [0, 28], sizes = [8, 4], strides = [1, 1]} : vector<8x32xbf16> to vector<8x4xbf16>
    %194 = vector.extract_strided_slice %65 {offsets = [0, 28], sizes = [8, 4], strides = [1, 1]} : vector<8x32xbf16> to vector<8x4xbf16>
    %cst_73 = arith.constant dense<0.000000e+00> : vector<8x8xf32>
    %195 = tpu.matmul %192, %193, %cst_73 {dimension_numbers = #tpu.dot_dimension_numbers<[1], [1], [0], [0], [0, 0, 1, 0], [], []>} : vector<8x4xbf16>, vector<8x4xbf16>, vector<8x8xf32> -> vector<8x8xf32>
    %cst_74 = arith.constant 5.000000e-01 : f32
    %196 = vector.broadcast %cst_74 : f32 to vector<8x8xf32>
    %197 = arith.mulf %195, %196 : vector<8x8xf32>
    %cst_75 = arith.constant dense<0xFF800000> : vector<8xf32>
    %198 = vector.multi_reduction <maximumf>, %197, %cst_75 [1] : vector<8x8xf32> to vector<8xf32>
    %199 = vector.shape_cast %198 : vector<8xf32> to vector<8x1xf32>
    %200 = vector.broadcast %199 : vector<8x1xf32> to vector<8x8xf32>
    %201 = arith.subf %197, %200 : vector<8x8xf32>
    %202 = math.exp %201 : vector<8x8xf32>
    %cst_76 = arith.constant dense<0.000000e+00> : vector<8xf32>
    %203 = vector.multi_reduction <add>, %202, %cst_76 [1] : vector<8x8xf32> to vector<8xf32>
    %204 = vector.shape_cast %203 : vector<8xf32> to vector<8x1xf32>
    %205 = tpu.reciprocal %204 {approx = true} : vector<8x1xf32> -> vector<8x1xf32>
    %206 = vector.broadcast %205 : vector<8x1xf32> to vector<8x8xf32>
    %207 = arith.mulf %202, %206 : vector<8x8xf32>
    %208 = arith.truncf %207 : vector<8x8xf32> to vector<8x8xbf16>
    %cst_77 = arith.constant dense<0.000000e+00> : vector<8x4xf32>
    %209 = tpu.matmul %208, %194, %cst_77 {dimension_numbers = #tpu.dot_dimension_numbers<[1], [0], [0], [1], [0, 0, 1, 1], [], []>} : vector<8x8xbf16>, vector<8x4xbf16>, vector<8x4xf32> -> vector<8x4xf32>
    %210 = tpu.concatenate %83, %101, %119, %137, %155, %173, %191, %209 in 1 : vector<8x4xf32>, vector<8x4xf32>, vector<8x4xf32>, vector<8x4xf32>, vector<8x4xf32>, vector<8x4xf32>, vector<8x4xf32>, vector<8x4xf32> -> vector<8x32xf32>
    %211 = arith.truncf %210 : vector<8x32xf32> to vector<8x32xbf16>
    %c0_78 = arith.constant 0 : index
    %c0_79 = arith.constant 0 : index
    %212 = vector.load %arg16[%c0_78, %c0_79] : memref<32x32xf32, #tpu.memory_space<vmem>>, vector<32x32xf32>
    %213 = arith.truncf %212 : vector<32x32xf32> to vector<32x32xbf16>
    %cst_80 = arith.constant dense<0.000000e+00> : vector<8x32xf32>
    %214 = tpu.matmul %211, %213, %cst_80 {dimension_numbers = #tpu.dot_dimension_numbers<[1], [0], [0], [1], [0, 0, 1, 1], [], []>} : vector<8x32xbf16>, vector<32x32xbf16>, vector<8x32xf32> -> vector<8x32xf32>
    %c0_81 = arith.constant 0 : index
    %c0_82 = arith.constant 0 : index
    %215 = vector.load %arg17[%c0_81, %c0_82] : memref<1x32xf32, #tpu.memory_space<vmem>>, vector<1x32xf32>
    %216 = vector.broadcast %215 : vector<1x32xf32> to vector<8x32xf32>
    %217 = arith.addf %214, %216 : vector<8x32xf32>
    %cst_83 = arith.constant dense<0.000000e+00> : vector<32xf32>
    %218 = vector.multi_reduction <add>, %217, %cst_83 [0] : vector<8x32xf32> to vector<32xf32>
    %219 = vector.shape_cast %218 : vector<32xf32> to vector<1x32xf32>
    %cst_84 = arith.constant 8.000000e+00 : f32
    %220 = vector.broadcast %cst_84 : f32 to vector<1x32xf32>
    %221 = arith.divf %219, %220 : vector<1x32xf32>
    %222 = vector.shape_cast %221 : vector<1x32xf32> to vector<1x1x32xf32>
    %c0_85 = arith.constant 0 : index
    %c0_86 = arith.constant 0 : index
    %c0_87 = arith.constant 0 : index
    %223 = vector.load %arg18[%c0_85, %c0_86, %c0_87] : memref<1x1x32xf32, #tpu.memory_space<vmem>>, vector<1x1x32xf32>
    tpu.vector_store %arg18[%c0_85, %c0_86, %c0_87], %222 {strides = array<i32>} : memref<1x1x32xf32, #tpu.memory_space<vmem>>, vector<1x1x32xf32>,
    %cst_88 = arith.constant dense<0.000000e+00> : vector<32xf32>
    %224 = vector.multi_reduction <add>, %6, %cst_88 [0] : vector<8x32xf32> to vector<32xf32>
    %225 = vector.shape_cast %224 : vector<32xf32> to vector<1x32xf32>
    %cst_89 = arith.constant 8.000000e+00 : f32
    %226 = vector.broadcast %cst_89 : f32 to vector<1x32xf32>
    %227 = arith.divf %225, %226 : vector<1x32xf32>
    %228 = vector.shape_cast %227 : vector<1x32xf32> to vector<1x1x32xf32>
    %c0_90 = arith.constant 0 : index
    %c0_91 = arith.constant 0 : index
    %c0_92 = arith.constant 0 : index
    %229 = vector.load %arg19[%c0_90, %c0_91, %c0_92] : memref<1x1x32xf32, #tpu.memory_space<vmem>>, vector<1x1x32xf32>
    tpu.vector_store %arg19[%c0_90, %c0_91, %c0_92], %228 {strides = array<i32>} : memref<1x1x32xf32, #tpu.memory_space<vmem>>, vector<1x1x32xf32>,
    return
  }
  func.func @transform_0(%arg0: i32) -> (i32, i32, i32) {
    %c0_i32 = arith.constant 0 : i32
    %c0_i32_0 = arith.constant 0 : i32
    %c0_i32_1 = arith.constant 0 : i32
    return %arg0, %c0_i32, %c0_i32_0 : i32, i32, i32
  }
  func.func @transform_1(%arg0: i32) -> (i32, i32, i32) {
    %c0_i32 = arith.constant 0 : i32
    %c0_i32_0 = arith.constant 0 : i32
    %c0_i32_1 = arith.constant 0 : i32
    return %arg0, %c0_i32, %c0_i32_0 : i32, i32, i32
  }
  func.func @transform_2(%arg0: i32) -> (i32, i32, i32) {
    %c0_i32 = arith.constant 0 : i32
    %c0_i32_0 = arith.constant 0 : i32
    %c0_i32_1 = arith.constant 0 : i32
    return %arg0, %c0_i32, %c0_i32_0 : i32, i32, i32
  }
  func.func @transform_3(%arg0: i32) -> (i32, i32) {
    %c0_i32 = arith.constant 0 : i32
    %c0_i32_0 = arith.constant 0 : i32
    %c0_i32_1 = arith.constant 0 : i32
    return %c0_i32, %c0_i32_0 : i32, i32
  }
  func.func @transform_4(%arg0: i32) -> (i32, i32) {
    %c0_i32 = arith.constant 0 : i32
    %c0_i32_0 = arith.constant 0 : i32
    %c0_i32_1 = arith.constant 0 : i32
    return %c0_i32, %c0_i32_0 : i32, i32
  }
  func.func @transform_5(%arg0: i32) -> (i32, i32) {
    %c0_i32 = arith.constant 0 : i32
    %c0_i32_0 = arith.constant 0 : i32
    %c0_i32_1 = arith.constant 0 : i32
    return %c0_i32, %c0_i32_0 : i32, i32
  }
  func.func @transform_6(%arg0: i32) -> (i32, i32) {
    %c0_i32 = arith.constant 0 : i32
    %c0_i32_0 = arith.constant 0 : i32
    %c0_i32_1 = arith.constant 0 : i32
    return %c0_i32, %c0_i32_0 : i32, i32
  }
  func.func @transform_7(%arg0: i32) -> (i32, i32) {
    %c0_i32 = arith.constant 0 : i32
    %c0_i32_0 = arith.constant 0 : i32
    %c0_i32_1 = arith.constant 0 : i32
    return %c0_i32, %c0_i32_0 : i32, i32
  }
  func.func @transform_8(%arg0: i32) -> (i32, i32) {
    %c0_i32 = arith.constant 0 : i32
    %c0_i32_0 = arith.constant 0 : i32
    %c0_i32_1 = arith.constant 0 : i32
    return %c0_i32, %c0_i32_0 : i32, i32
  }
  func.func @transform_9(%arg0: i32) -> (i32, i32) {
    %c0_i32 = arith.constant 0 : i32
    %c0_i32_0 = arith.constant 0 : i32
    %c0_i32_1 = arith.constant 0 : i32
    return %c0_i32, %c0_i32_0 : i32, i32
  }
  func.func @transform_10(%arg0: i32) -> (i32, i32) {
    %c0_i32 = arith.constant 0 : i32
    %c0_i32_0 = arith.constant 0 : i32
    %c0_i32_1 = arith.constant 0 : i32
    return %c0_i32, %c0_i32_0 : i32, i32
  }
  func.func @transform_11(%arg0: i32) -> (i32, i32) {
    %c0_i32 = arith.constant 0 : i32
    %c0_i32_0 = arith.constant 0 : i32
    %c0_i32_1 = arith.constant 0 : i32
    return %c0_i32, %c0_i32_0 : i32, i32
  }
  func.func @transform_12(%arg0: i32) -> (i32, i32) {
    %c0_i32 = arith.constant 0 : i32
    %c0_i32_0 = arith.constant 0 : i32
    %c0_i32_1 = arith.constant 0 : i32
    return %c0_i32, %c0_i32_0 : i32, i32
  }
  func.func @transform_13(%arg0: i32) -> (i32, i32) {
    %c0_i32 = arith.constant 0 : i32
    %c0_i32_0 = arith.constant 0 : i32
    %c0_i32_1 = arith.constant 0 : i32
    return %c0_i32, %c0_i32_0 : i32, i32
  }
  func.func @transform_14(%arg0: i32) -> (i32, i32) {
    %c0_i32 = arith.constant 0 : i32
    %c0_i32_0 = arith.constant 0 : i32
    %c0_i32_1 = arith.constant 0 : i32
    return %c0_i32, %c0_i32_0 : i32, i32
  }
  func.func @transform_15(%arg0: i32) -> (i32, i32) {
    %c0_i32 = arith.constant 0 : i32
    %c0_i32_0 = arith.constant 0 : i32
    %c0_i32_1 = arith.constant 0 : i32
    return %c0_i32, %c0_i32_0 : i32, i32
  }
  func.func @transform_16(%arg0: i32) -> (i32, i32) {
    %c0_i32 = arith.constant 0 : i32
    %c0_i32_0 = arith.constant 0 : i32
    %c0_i32_1 = arith.constant 0 : i32
    return %c0_i32, %c0_i32_0 : i32, i32
  }
  func.func @transform_17(%arg0: i32) -> (i32, i32, i32) {
    %c0_i32 = arith.constant 0 : i32
    %c0_i32_0 = arith.constant 0 : i32
    %c0_i32_1 = arith.constant 0 : i32
    return %arg0, %c0_i32, %c0_i32_0 : i32, i32, i32
  }
  func.func @transform_18(%arg0: i32) -> (i32, i32, i32) {
    %c0_i32 = arith.constant 0 : i32
    %c0_i32_0 = arith.constant 0 : i32
    %c0_i32_1 = arith.constant 0 : i32
    return %arg0, %c0_i32, %c0_i32_0 : i32, i32, i32
  }
}

</mosaic_0001>

<llo_original>
// kernel: adversarial_net_forward.1
$region0: #{adversarial_net_forward.1}
  #allocation0 [shape = 'u32[]', space=smem, size = 0x4, offset = 0x4, fixed_abs, tag = 'smem constant byte address 0x4 - core index']
  #allocation1 [shape = 'u32[72,128]{1,0:T(1,128)}', space=vmem, size = 0x9000, scoped, tag = 'internal scratch']
  %s0 = inlined_call_operand.vmem [shape: f32[2,8,32], index: 0, kind: input, shape index: {}]
  %s1 = inlined_call_operand.hbm [shape: f32[2,8,32], index: 1, kind: input, shape index: {}]
  %s2 = inlined_call_operand.vmem [shape: s32[2,8,1], index: 2, kind: input, shape index: {}]
  %s3 = inlined_call_operand.hbm [shape: f32[32,32], index: 3, kind: input, shape index: {}]
  %s4 = inlined_call_operand.vmem [shape: f32[1,32], index: 4, kind: input, shape index: {}]
  %s5 = inlined_call_operand.hbm [shape: f32[32,32], index: 5, kind: input, shape index: {}]
  %s6 = inlined_call_operand.vmem [shape: f32[1,32], index: 6, kind: input, shape index: {}]
  %s7 = inlined_call_operand.hbm [shape: f32[32,32], index: 7, kind: input, shape index: {}]
  %s8 = inlined_call_operand.vmem [shape: f32[1,32], index: 8, kind: input, shape index: {}]
  %s9 = inlined_call_operand.hbm [shape: f32[32,32], index: 9, kind: input, shape index: {}]
  %s10 = inlined_call_operand.vmem [shape: f32[1,32], index: 10, kind: input, shape index: {}]
  %s11 = inlined_call_operand.hbm [shape: f32[32,32], index: 11, kind: input, shape index: {}]
  %s12 = inlined_call_operand.vmem [shape: f32[1,32], index: 12, kind: input, shape index: {}]
  %s13 = inlined_call_operand.hbm [shape: f32[32,32], index: 13, kind: input, shape index: {}]
  %s14 = inlined_call_operand.vmem [shape: f32[1,32], index: 14, kind: input, shape index: {}]
  %s15 = inlined_call_operand.hbm [shape: f32[32,32], index: 15, kind: input, shape index: {}]
  %s16 = inlined_call_operand.vmem [shape: f32[1,32], index: 16, kind: input, shape index: {}]
  %s17 = inlined_call_operand.vmem [shape: f32[2,1,32], index: 17, kind: output, shape index: {0}]
  %s18 = inlined_call_operand.vmem [shape: f32[2,1,32], index: 18, kind: output, shape index: {1}]
  %19 = xla_tuple %s17, %s18
  %s20 = sld [smem:[#allocation0]]
  $region141: #{adversarial_net_forward.1} parent=0
    _
  %s22 = ssub.s32 1, %s20
  %s23 = scalar_select 0, %s22, %s20
  $region1: #{adversarial_net_forward.1} parent=0
    #allocation2 [shape = 'u8[8192]{0}', space=vmem, size = 0x2000, scoped, tag = 'input window, operand 1']
    #allocation3 [shape = 's32[2]{0}', space=sflag, size = 0x8, scoped, tag = 'scoped memory for adversarial_net_forward.1']
    #allocation4 [shape = 'u8[16384]{0}', space=vmem, size = 0x4000, scoped, tag = 'input window, operand 3, single buffered']
    #allocation5 [shape = 's32[1]{0}', space=sflag, size = 0x4, scoped, tag = 'scoped memory for adversarial_net_forward.1']
    #allocation6 [shape = 'u8[16384]{0}', space=vmem, size = 0x4000, scoped, tag = 'input window, operand 5, single buffered']
    #allocation7 [shape = 'u8[16384]{0}', space=vmem, size = 0x4000, scoped, tag = 'input window, operand 7, single buffered']
    #allocation8 [shape = 's32[1]{0}', space=sflag, size = 0x4, scoped, tag = 'scoped memory for adversarial_net_forward.1']
    #allocation9 [shape = 'u8[16384]{0}', space=vmem, size = 0x4000, scoped, tag = 'input window, operand 9, single buffered']
    #allocation10 [shape = 'u8[16384]{0}', space=vmem, size = 0x4000, scoped, tag = 'input window, operand 11, single buffered']
    #allocation11 [shape = 's32[1]{0}', space=sflag, size = 0x4, scoped, tag = 'scoped memory for adversarial_net_forward.1']
    #allocation12 [shape = 'u8[16384]{0}', space=vmem, size = 0x4000, scoped, tag = 'input window, operand 13, single buffered']
    #allocation13 [shape = 'u8[16384]{0}', space=vmem, size = 0x4000, scoped, tag = 'input window, operand 15, single buffered']
    #allocation14 [shape = 's32[1]{0}', space=sflag, size = 0x4, scoped, tag = 'scoped memory for adversarial_net_forward.1']
    %24 = vsyncpa [#allocation3], 0
    %s25 = scalar_lea.sflag [#allocation3], 1
    %26 = vsyncpa %s25, 0
    %27 = vsyncpa [#allocation5], 0
    %28 = vsyncpa [#allocation8], 0
    %29 = vsyncpa [#allocation11], 0
    %30 = vsyncpa [#allocation14], 0
    loop: start=0, step=1, limit=4
    $region2: #{adversarial_net_forward.1} parent=1 // loop_pre_header
      _
    $region3: #{adversarial_net_forward.1} parent=1 // loop_header
      %s32 = sphi 0, %s36
      %p33 = scmp.ge.s32.totalorder %s32, 4
      %s42 = sphi 0, %s44
      %s45 = sphi 0, %s42
      %s46 = sphi 0, %s45
      %s62 = sphi 0, %s46
      %s68 = sphi 0, %s70
      %s71 = sphi 0, %s68
      %s72 = sphi 0, %s71
      %s88 = sphi 0, %s72
      %s94 = sphi 0, %s96
      %s97 = sphi 0, %s94
      %s98 = sphi 0, %s97
      %s114 = sphi 0, %s98
      %s118 = sphi 0, %s118
      %s120 = sphi 0, %s118
      %s121 = sphi 0, %s120
      %s135 = sphi 0, %s121
      %s139 = sphi 0, %s139
      %s141 = sphi 0, %s139
      %s142 = sphi 0, %s141
      %s156 = sphi 0, %s142
      %s160 = sphi 0, %s160
      %s162 = sphi 0, %s160
      %s163 = sphi 0, %s162
      %s177 = sphi 0, %s163
      %s181 = sphi 0, %s181
      %s183 = sphi 0, %s181
      %s184 = sphi 0, %s183
      %s198 = sphi 0, %s184
      %s202 = sphi 0, %s202
      %s204 = sphi 0, %s202
      %s205 = sphi 0, %s204
      %s219 = sphi 0, %s205
      %s223 = sphi 0, %s223
      %s225 = sphi 0, %s223
      %s226 = sphi 0, %s225
      %s240 = sphi 0, %s226
      %s244 = sphi 0, %s244
      %s246 = sphi 0, %s244
      %s247 = sphi 0, %s246
      %s261 = sphi 0, %s247
      %s265 = sphi 0, %s265
      %s267 = sphi 0, %s265
      %s268 = sphi 0, %s267
      %s282 = sphi 0, %s268
      %s286 = sphi 0, %s286
      %s288 = sphi 0, %s286
      %s289 = sphi 0, %s288
      %s303 = sphi 0, %s289
      %s307 = sphi 0, %s307
      %s309 = sphi 0, %s307
      %s310 = sphi 0, %s309
      %s324 = sphi 0, %s310
      %s328 = sphi 0, %s328
      %s330 = sphi 0, %s328
      %s331 = sphi 0, %s330
      %s345 = sphi 0, %s331
      %s349 = sphi 0, %s349
      %s351 = sphi 0, %s349
      %s352 = sphi 0, %s351
      %s366 = sphi 0, %s352
      %s370 = sphi 0, %s370
      %s372 = sphi 0, %s370
      %s373 = sphi 0, %s372
      %s387 = sphi 0, %s373
      %s391 = sphi 0, %s391
      %s393 = sphi 0, %s391
      %s394 = sphi 0, %s393
      %s408 = sphi 0, %s394
      %s414 = sphi 0, %s416
      %s417 = sphi 0, %s414
      %s418 = sphi 0, %s417
      %s434 = sphi 0, %s418
      %s440 = sphi 0, %s442
      %s443 = sphi 0, %s440
      %s444 = sphi 0, %s443
      %s460 = sphi 0, %s444
    $region4: #{adversarial_net_forward.1} parent=1 // loop_header_branch
      %35 = sbr.rel (%p33) target = $region8
    $region5: #{adversarial_net_forward.1} parent=1 // loop_body
      %s37 = ssub.s32 %s32, 1
      %s38 = ssub.s32 %s32, 2
      %s39 = sadd.s32 %s32, 1
      %s40 = ssub.s32 %s32, %s39
      %p41 = scmp.eq.s32.totalorder %s40, 0
      %s43 = sadd.s32 %s42, 1
      %s44 = scalar_select %p41, %s42, %s43
      %p47 = pneg %p41
      %p48 = scmp.eq.s32.totalorder %s32, 1
      %p49 = por %p47, %p48
      %p50 = scmp.ne.s32.totalorder %s42, %s45
      %p51 = scmp.eq.s32.totalorder %s32, 0
      %p52 = por %p50, %p51
      %p53 = scmp.ne.s32.totalorder %s42, %s45
      %p54 = scmp.eq.s32.totalorder %s37, 1
      %p55 = por %p53, %p54
      %p56 = scmp.ne.s32.totalorder %s45, %s46
      %p57 = scmp.eq.s32.totalorder %s37, 0
      %p58 = por %p56, %p57
      %p59 = scmp.ne.s32.totalorder %s45, %s46
      %p60 = scmp.eq.s32.totalorder %s38, 1
      %p61 = por %p59, %p60
      %p63 = scmp.ne.s32.totalorder %s46, %s62
      %p64 = scmp.eq.s32.totalorder %s38, 0
      %p65 = por %p63, %p64
      %s66 = ssub.s32 %s32, %s39
      %p67 = scmp.eq.s32.totalorder %s66, 0
      %s69 = sadd.s32 %s68, 1
      %s70 = scalar_select %p67, %s68, %s69
      %p73 = pneg %p67
      %p74 = scmp.eq.s32.totalorder %s32, 1
      %p75 = por %p73, %p74
      %p76 = scmp.ne.s32.totalorder %s68, %s71
      %p77 = scmp.eq.s32.totalorder %s32, 0
      %p78 = por %p76, %p77
      %p79 = scmp.ne.s32.totalorder %s68, %s71
      %p80 = scmp.eq.s32.totalorder %s37, 1
      %p81 = por %p79, %p80
      %p82 = scmp.ne.s32.totalorder %s71, %s72
      %p83 = scmp.eq.s32.totalorder %s37, 0
      %p84 = por %p82, %p83
      %p85 = scmp.ne.s32.totalorder %s71, %s72
      %p86 = scmp.eq.s32.totalorder %s38, 1
      %p87 = por %p85, %p86
      %p89 = scmp.ne.s32.totalorder %s72, %s88
      %p90 = scmp.eq.s32.totalorder %s38, 0
      %p91 = por %p89, %p90
      %s92 = ssub.s32 %s32, %s39
      %p93 = scmp.eq.s32.totalorder %s92, 0
      %s95 = sadd.s32 %s94, 1
      %s96 = scalar_select %p93, %s94, %s95
      %p99 = pneg %p93
      %p100 = scmp.eq.s32.totalorder %s32, 1
      %p101 = por %p99, %p100
      %p102 = scmp.ne.s32.totalorder %s94, %s97
      %p103 = scmp.eq.s32.totalorder %s32, 0
      %p104 = por %p102, %p103
      %p105 = scmp.ne.s32.totalorder %s94, %s97
      %p106 = scmp.eq.s32.totalorder %s37, 1
      %p107 = por %p105, %p106
      %p108 = scmp.ne.s32.totalorder %s97, %s98
      %p109 = scmp.eq.s32.totalorder %s37, 0
      %p110 = por %p108, %p109
      %p111 = scmp.ne.s32.totalorder %s97, %s98
      %p112 = scmp.eq.s32.totalorder %s38, 1
      %p113 = por %p111, %p112
      %p115 = scmp.ne.s32.totalorder %s98, %s114
      %p116 = scmp.eq.s32.totalorder %s38, 0
      %p117 = por %p115, %p116
      %s119 = sadd.s32 %s118, 1
      %p122 = scmp.eq.s32.totalorder %s32, 1
      %p123 = scmp.ne.s32.totalorder %s118, %s120
      %p124 = scmp.eq.s32.totalorder %s32, 0
      %p125 = por %p123, %p124
      %p126 = scmp.ne.s32.totalorder %s118, %s120
      %p127 = scmp.eq.s32.totalorder %s37, 1
      %p128 = por %p126, %p127
      %p129 = scmp.ne.s32.totalorder %s120, %s121
      %p130 = scmp.eq.s32.totalorder %s37, 0
      %p131 = por %p129, %p130
      %p132 = scmp.ne.s32.totalorder %s120, %s121
      %p133 = scmp.eq.s32.totalorder %s38, 1
      %p134 = por %p132, %p133
      %p136 = scmp.ne.s32.totalorder %s121, %s135
      %p137 = scmp.eq.s32.totalorder %s38, 0
      %p138 = por %p136, %p137
      %s140 = sadd.s32 %s139, 1
      %p143 = scmp.eq.s32.totalorder %s32, 1
      %p144 = scmp.ne.s32.totalorder %s139, %s141
      %p145 = scmp.eq.s32.totalorder %s32, 0
      %p146 = por %p144, %p145
      %p147 = scmp.ne.s32.totalorder %s139, %s141
      %p148 = scmp.eq.s32.totalorder %s37, 1
      %p149 = por %p147, %p148
      %p150 = scmp.ne.s32.totalorder %s141, %s142
      %p151 = scmp.eq.s32.totalorder %s37, 0
      %p152 = por %p150, %p151
      %p153 = scmp.ne.s32.totalorder %s141, %s142
      %p154 = scmp.eq.s32.totalorder %s38, 1
      %p155 = por %p153, %p154
      %p157 = scmp.ne.s32.totalorder %s142, %s156
      %p158 = scmp.eq.s32.totalorder %s38, 0
      %p159 = por %p157, %p158
      %s161 = sadd.s32 %s160, 1
      %p164 = scmp.eq.s32.totalorder %s32, 1
      %p165 = scmp.ne.s32.totalorder %s160, %s162
      %p166 = scmp.eq.s32.totalorder %s32, 0
      %p167 = por %p165, %p166
      %p168 = scmp.ne.s32.totalorder %s160, %s162
      %p169 = scmp.eq.s32.totalorder %s37, 1
      %p170 = por %p168, %p169
      %p171 = scmp.ne.s32.totalorder %s162, %s163
      %p172 = scmp.eq.s32.totalorder %s37, 0
      %p173 = por %p171, %p172
      %p174 = scmp.ne.s32.totalorder %s162, %s163
      %p175 = scmp.eq.s32.totalorder %s38, 1
      %p176 = por %p174, %p175
      %p178 = scmp.ne.s32.totalorder %s163, %s177
      %p179 = scmp.eq.s32.totalorder %s38, 0
      %p180 = por %p178, %p179
      %s182 = sadd.s32 %s181, 1
      %p185 = scmp.eq.s32.totalorder %s32, 1
      %p186 = scmp.ne.s32.totalorder %s181, %s183
      %p187 = scmp.eq.s32.totalorder %s32, 0
      %p188 = por %p186, %p187
      %p189 = scmp.ne.s32.totalorder %s181, %s183
      %p190 = scmp.eq.s32.totalorder %s37, 1
      %p191 = por %p189, %p190
      %p192 = scmp.ne.s32.totalorder %s183, %s184
      %p193 = scmp.eq.s32.totalorder %s37, 0
      %p194 = por %p192, %p193
      %p195 = scmp.ne.s32.totalorder %s183, %s184
      %p196 = scmp.eq.s32.totalorder %s38, 1
      %p197 = por %p195, %p196
      %p199 = scmp.ne.s32.totalorder %s184, %s198
      %p200 = scmp.eq.s32.totalorder %s38, 0
      %p201 = por %p199, %p200
      %s203 = sadd.s32 %s202, 1
      %p206 = scmp.eq.s32.totalorder %s32, 1
      %p207 = scmp.ne.s32.totalorder %s202, %s204
      %p208 = scmp.eq.s32.totalorder %s32, 0
      %p209 = por %p207, %p208
      %p210 = scmp.ne.s32.totalorder %s202, %s204
      %p211 = scmp.eq.s32.totalorder %s37, 1
      %p212 = por %p210, %p211
      %p213 = scmp.ne.s32.totalorder %s204, %s205
      %p214 = scmp.eq.s32.totalorder %s37, 0
      %p215 = por %p213, %p214
      %p216 = scmp.ne.s32.totalorder %s204, %s205
      %p217 = scmp.eq.s32.totalorder %s38, 1
      %p218 = por %p216, %p217
      %p220 = scmp.ne.s32.totalorder %s205, %s219
      %p221 = scmp.eq.s32.totalorder %s38, 0
      %p222 = por %p220, %p221
      %s224 = sadd.s32 %s223, 1
      %p227 = scmp.eq.s32.totalorder %s32, 1
      %p228 = scmp.ne.s32.totalorder %s223, %s225
      %p229 = scmp.eq.s32.totalorder %s32, 0
      %p230 = por %p228, %p229
      %p231 = scmp.ne.s32.totalorder %s223, %s225
      %p232 = scmp.eq.s32.totalorder %s37, 1
      %p233 = por %p231, %p232
      %p234 = scmp.ne.s32.totalorder %s225, %s226
      %p235 = scmp.eq.s32.totalorder %s37, 0
      %p236 = por %p234, %p235
      %p237 = scmp.ne.s32.totalorder %s225, %s226
      %p238 = scmp.eq.s32.totalorder %s38, 1
      %p239 = por %p237, %p238
      %p241 = scmp.ne.s32.totalorder %s226, %s240
      %p242 = scmp.eq.s32.totalorder %s38, 0
      %p243 = por %p241, %p242
      %s245 = sadd.s32 %s244, 1
      %p248 = scmp.eq.s32.totalorder %s32, 1
      %p249 = scmp.ne.s32.totalorder %s244, %s246
      %p250 = scmp.eq.s32.totalorder %s32, 0
      %p251 = por %p249, %p250
      %p252 = scmp.ne.s32.totalorder %s244, %s246
      %p253 = scmp.eq.s32.totalorder %s37, 1
      %p254 = por %p252, %p253
      %p255 = scmp.ne.s32.totalorder %s246, %s247
      %p256 = scmp.eq.s32.totalorder %s37, 0
      %p257 = por %p255, %p256
      %p258 = scmp.ne.s32.totalorder %s246, %s247
      %p259 = scmp.eq.s32.totalorder %s38, 1
      %p260 = por %p258, %p259
      %p262 = scmp.ne.s32.totalorder %s247, %s261
      %p263 = scmp.eq.s32.totalorder %s38, 0
      %p264 = por %p262, %p263
      %s266 = sadd.s32 %s265, 1
      %p269 = scmp.eq.s32.totalorder %s32, 1
      %p270 = scmp.ne.s32.totalorder %s265, %s267
      %p271 = scmp.eq.s32.totalorder %s32, 0
      %p272 = por %p270, %p271
      %p273 = scmp.ne.s32.totalorder %s265, %s267
      %p274 = scmp.eq.s32.totalorder %s37, 1
      %p275 = por %p273, %p274
      %p276 = scmp.ne.s32.totalorder %s267, %s268
      %p277 = scmp.eq.s32.totalorder %s37, 0
      %p278 = por %p276, %p277
      %p279 = scmp.ne.s32.totalorder %s267, %s268
      %p280 = scmp.eq.s32.totalorder %s38, 1
      %p281 = por %p279, %p280
      %p283 = scmp.ne.s32.totalorder %s268, %s282
      %p284 = scmp.eq.s32.totalorder %s38, 0
      %p285 = por %p283, %p284
      %s287 = sadd.s32 %s286, 1
      %p290 = scmp.eq.s32.totalorder %s32, 1
      %p291 = scmp.ne.s32.totalorder %s286, %s288
      %p292 = scmp.eq.s32.totalorder %s32, 0
      %p293 = por %p291, %p292
      %p294 = scmp.ne.s32.totalorder %s286, %s288
      %p295 = scmp.eq.s32.totalorder %s37, 1
      %p296 = por %p294, %p295
      %p297 = scmp.ne.s32.totalorder %s288, %s289
      %p298 = scmp.eq.s32.totalorder %s37, 0
      %p299 = por %p297, %p298
      %p300 = scmp.ne.s32.totalorder %s288, %s289
      %p301 = scmp.eq.s32.totalorder %s38, 1
      %p302 = por %p300, %p301
      %p304 = scmp.ne.s32.totalorder %s289, %s303
      %p305 = scmp.eq.s32.totalorder %s38, 0
      %p306 = por %p304, %p305
      %s308 = sadd.s32 %s307, 1
      %p311 = scmp.eq.s32.totalorder %s32, 1
      %p312 = scmp.ne.s32.totalorder %s307, %s309
      %p313 = scmp.eq.s32.totalorder %s32, 0
      %p314 = por %p312, %p313
      %p315 = scmp.ne.s32.totalorder %s307, %s309
      %p316 = scmp.eq.s32.totalorder %s37, 1
      %p317 = por %p315, %p316
      %p318 = scmp.ne.s32.totalorder %s309, %s310
      %p319 = scmp.eq.s32.totalorder %s37, 0
      %p320 = por %p318, %p319
      %p321 = scmp.ne.s32.totalorder %s309, %s310
      %p322 = scmp.eq.s32.totalorder %s38, 1
      %p323 = por %p321, %p322
      %p325 = scmp.ne.s32.totalorder %s310, %s324
      %p326 = scmp.eq.s32.totalorder %s38, 0
      %p327 = por %p325, %p326
      %s329 = sadd.s32 %s328, 1
      %p332 = scmp.eq.s32.totalorder %s32, 1
      %p333 = scmp.ne.s32.totalorder %s328, %s330
      %p334 = scmp.eq.s32.totalorder %s32, 0
      %p335 = por %p333, %p334
      %p336 = scmp.ne.s32.totalorder %s328, %s330
      %p337 = scmp.eq.s32.totalorder %s37, 1
      %p338 = por %p336, %p337
      %p339 = scmp.ne.s32.totalorder %s330, %s331
      %p340 = scmp.eq.s32.totalorder %s37, 0
      %p341 = por %p339, %p340
      %p342 = scmp.ne.s32.totalorder %s330, %s331
      %p343 = scmp.eq.s32.totalorder %s38, 1
      %p344 = por %p342, %p343
      %p346 = scmp.ne.s32.totalorder %s331, %s345
      %p347 = scmp.eq.s32.totalorder %s38, 0
      %p348 = por %p346, %p347
      %s350 = sadd.s32 %s349, 1
      %p353 = scmp.eq.s32.totalorder %s32, 1
      %p354 = scmp.ne.s32.totalorder %s349, %s351
      %p355 = scmp.eq.s32.totalorder %s32, 0
      %p356 = por %p354, %p355
      %p357 = scmp.ne.s32.totalorder %s349, %s351
      %p358 = scmp.eq.s32.totalorder %s37, 1
      %p359 = por %p357, %p358
      %p360 = scmp.ne.s32.totalorder %s351, %s352
      %p361 = scmp.eq.s32.totalorder %s37, 0
      %p362 = por %p360, %p361
      %p363 = scmp.ne.s32.totalorder %s351, %s352
      %p364 = scmp.eq.s32.totalorder %s38, 1
      %p365 = por %p363, %p364
      %p367 = scmp.ne.s32.totalorder %s352, %s366
      %p368 = scmp.eq.s32.totalorder %s38, 0
      %p369 = por %p367, %p368
      %s371 = sadd.s32 %s370, 1
      %p374 = scmp.eq.s32.totalorder %s32, 1
      %p375 = scmp.ne.s32.totalorder %s370, %s372
      %p376 = scmp.eq.s32.totalorder %s32, 0
      %p377 = por %p375, %p376
      %p378 = scmp.ne.s32.totalorder %s370, %s372
      %p379 = scmp.eq.s32.totalorder %s37, 1
      %p380 = por %p378, %p379
      %p381 = scmp.ne.s32.totalorder %s372, %s373
      %p382 = scmp.eq.s32.totalorder %s37, 0
      %p383 = por %p381, %p382
      %p384 = scmp.ne.s32.totalorder %s372, %s373
      %p385 = scmp.eq.s32.totalorder %s38, 1
      %p386 = por %p384, %p385
      %p388 = scmp.ne.s32.totalorder %s373, %s387
      %p389 = scmp.eq.s32.totalorder %s38, 0
      %p390 = por %p388, %p389
      %s392 = sadd.s32 %s391, 1
      %p395 = scmp.eq.s32.totalorder %s32, 1
      %p396 = scmp.ne.s32.totalorder %s391, %s393
      %p397 = scmp.eq.s32.totalorder %s32, 0
      %p398 = por %p396, %p397
      %p399 = scmp.ne.s32.totalorder %s391, %s393
      %p400 = scmp.eq.s32.totalorder %s37, 1
      %p401 = por %p399, %p400
      %p402 = scmp.ne.s32.totalorder %s393, %s394
      %p403 = scmp.eq.s32.totalorder %s37, 0
      %p404 = por %p402, %p403
      %p405 = scmp.ne.s32.totalorder %s393, %s394
      %p406 = scmp.eq.s32.totalorder %s38, 1
      %p407 = por %p405, %p406
      %p409 = scmp.ne.s32.totalorder %s394, %s408
      %p410 = scmp.eq.s32.totalorder %s38, 0
      %p411 = por %p409, %p410
      %s412 = ssub.s32 %s32, %s39
      %p413 = scmp.eq.s32.totalorder %s412, 0
      %s415 = sadd.s32 %s414, 1
      %s416 = scalar_select %p413, %s414, %s415
      %p419 = pneg %p413
      %p420 = scmp.eq.s32.totalorder %s32, 1
      %p421 = por %p419, %p420
      %p422 = scmp.ne.s32.totalorder %s414, %s417
      %p423 = scmp.eq.s32.totalorder %s32, 0
      %p424 = por %p422, %p423
      %p425 = scmp.ne.s32.totalorder %s414, %s417
      %p426 = scmp.eq.s32.totalorder %s37, 1
      %p427 = por %p425, %p426
      %p428 = scmp.ne.s32.totalorder %s417, %s418
      %p429 = scmp.eq.s32.totalorder %s37, 0
      %p430 = por %p428, %p429
      %p431 = scmp.ne.s32.totalorder %s417, %s418
      %p432 = scmp.eq.s32.totalorder %s38, 1
      %p433 = por %p431, %p432
      %p435 = scmp.ne.s32.totalorder %s418, %s434
      %p436 = scmp.eq.s32.totalorder %s38, 0
      %p437 = por %p435, %p436
      %s438 = ssub.s32 %s32, %s39
      %p439 = scmp.eq.s32.totalorder %s438, 0
      %s441 = sadd.s32 %s440, 1
      %s442 = scalar_select %p439, %s440, %s441
      %p445 = pneg %p439
      %p446 = scmp.eq.s32.totalorder %s32, 1
      %p447 = por %p445, %p446
      %p448 = scmp.ne.s32.totalorder %s440, %s443
      %p449 = scmp.eq.s32.totalorder %s32, 0
      %p450 = por %p448, %p449
      %p451 = scmp.ne.s32.totalorder %s440, %s443
      %p452 = scmp.eq.s32.totalorder %s37, 1
      %p453 = por %p451, %p452
      %p454 = scmp.ne.s32.totalorder %s443, %s444
      %p455 = scmp.eq.s32.totalorder %s37, 0
      %p456 = por %p454, %p455
      %p457 = scmp.ne.s32.totalorder %s443, %s444
      %p458 = scmp.eq.s32.totalorder %s38, 1
      %p459 = por %p457, %p458
      %p461 = scmp.ne.s32.totalorder %s444, %s460
      %p462 = scmp.eq.s32.totalorder %s38, 0
      %p463 = por %p461, %p462
      %p464 = scmp.le.s32.totalorder 1, %s32
      %p465 = scmp.lt.s32.totalorder %s32, 3
      %p466 = pnand %p464, %p465
      %p467 = pneg %p466
      // Predicated region
      $region9: #{adversarial_net_forward.1} parent=5 // pred_check
        _
      $region10: #{adversarial_net_forward.1} parent=5 // pred_check_branch
        %469 = sbr.rel (%p466) target = $region12
      $region11: #{adversarial_net_forward.1} parent=5 // pred_region
        %s470 = ssub.s32 %s32, 1
        // Predicated region
        $region13: #{adversarial_net_forward.1} parent=11 // pred_check
          %p471 = pneg %p131
        $region14: #{adversarial_net_forward.1} parent=11 // pred_check_branch
          %473 = sbr.rel (%p471) target = $region16
        $region15: #{adversarial_net_forward.1} parent=11 // pred_region
          %475 = vsyncadd [#allocation5], 0
          %s476 = sshll.u32 %s3, 4
          %s477 = int_to_ptr.hbm [resolvable:$true] %s476
          %s478 = sshll.u32 [#allocation4], 4
          %s479 = int_to_ptr.vmem [resolvable:$true] %s478
          %484 = dma.hbm_to_vmem [thread:$0]  %s477, 512, %s479, [#allocation5], 128, 128, 8
        $region16: #{adversarial_net_forward.1} parent=11 // pred_fallthru
          _
        // Predicated region
        $region17: #{adversarial_net_forward.1} parent=11 // pred_check
          %p485 = pneg %p152
        $region18: #{adversarial_net_forward.1} parent=11 // pred_check_branch
          %487 = sbr.rel (%p485) target = $region20
        $region19: #{adversarial_net_forward.1} parent=11 // pred_region
          _
        $region20: #{adversarial_net_forward.1} parent=11 // pred_fallthru
          _
        // Predicated region
        $region21: #{adversarial_net_forward.1} parent=11 // pred_check
          %p488 = pneg %p173
        $region22: #{adversarial_net_forward.1} parent=11 // pred_check_branch
          %490 = sbr.rel (%p488) target = $region24
        $region23: #{adversarial_net_forward.1} parent=11 // pred_region
          %492 = vsyncadd [#allocation5], 0
          %s493 = sshll.u32 %s5, 4
          %s494 = int_to_ptr.hbm [resolvable:$true] %s493
          %s495 = sshll.u32 [#allocation6], 4
          %s496 = int_to_ptr.vmem [resolvable:$true] %s495
          %501 = dma.hbm_to_vmem [thread:$0]  %s494, 512, %s496, [#allocation5], 128, 128, 8
        $region24: #{adversarial_net_forward.1} parent=11 // pred_fallthru
          _
        // Predicated region
        $region25: #{adversarial_net_forward.1} parent=11 // pred_check
          %p502 = pneg %p194
        $region26: #{adversarial_net_forward.1} parent=11 // pred_check_branch
          %504 = sbr.rel (%p502) target = $region28
        $region27: #{adversarial_net_forward.1} parent=11 // pred_region
          _
        $region28: #{adversarial_net_forward.1} parent=11 // pred_fallthru
          _
        // Predicated region
        $region29: #{adversarial_net_forward.1} parent=11 // pred_check
          %p505 = pneg %p215
        $region30: #{adversarial_net_forward.1} parent=11 // pred_check_branch
          %507 = sbr.rel (%p505) target = $region32
        $region31: #{adversarial_net_forward.1} parent=11 // pred_region
          %509 = vsyncadd [#allocation8], 0
          %s510 = sshll.u32 %s7, 4
          %s511 = int_to_ptr.hbm [resolvable:$true] %s510
          %s512 = sshll.u32 [#allocation7], 4
          %s513 = int_to_ptr.vmem [resolvable:$true] %s512
          %518 = dma.hbm_to_vmem [thread:$0]  %s511, 512, %s513, [#allocation8], 128, 128, 8
        $region32: #{adversarial_net_forward.1} parent=11 // pred_fallthru
          _
        // Predicated region
        $region33: #{adversarial_net_forward.1} parent=11 // pred_check
          %p519 = pneg %p236
        $region34: #{adversarial_net_forward.1} parent=11 // pred_check_branch
          %521 = sbr.rel (%p519) target = $region36
        $region35: #{adversarial_net_forward.1} parent=11 // pred_region
          _
        $region36: #{adversarial_net_forward.1} parent=11 // pred_fallthru
          _
        // Predicated region
        $region37: #{adversarial_net_forward.1} parent=11 // pred_check
          %p522 = pneg %p257
        $region38: #{adversarial_net_forward.1} parent=11 // pred_check_branch
          %524 = sbr.rel (%p522) target = $region40
        $region39: #{adversarial_net_forward.1} parent=11 // pred_region
          %526 = vsyncadd [#allocation8], 0
          %s527 = sshll.u32 %s9, 4
          %s528 = int_to_ptr.hbm [resolvable:$true] %s527
          %s529 = sshll.u32 [#allocation9], 4
          %s530 = int_to_ptr.vmem [resolvable:$true] %s529
          %535 = dma.hbm_to_vmem [thread:$0]  %s528, 512, %s530, [#allocation8], 128, 128, 8
        $region40: #{adversarial_net_forward.1} parent=11 // pred_fallthru
          _
        // Predicated region
        $region41: #{adversarial_net_forward.1} parent=11 // pred_check
          %p536 = pneg %p278
        $region42: #{adversarial_net_forward.1} parent=11 // pred_check_branch
          %538 = sbr.rel (%p536) target = $region44
        $region43: #{adversarial_net_forward.1} parent=11 // pred_region
          _
        $region44: #{adversarial_net_forward.1} parent=11 // pred_fallthru
          _
        // Predicated region
        $region45: #{adversarial_net_forward.1} parent=11 // pred_check
          %p539 = pneg %p299
        $region46: #{adversarial_net_forward.1} parent=11 // pred_check_branch
          %541 = sbr.rel (%p539) target = $region48
        $region47: #{adversarial_net_forward.1} parent=11 // pred_region
          %543 = vsyncadd [#allocation11], 0
          %s544 = sshll.u32 %s11, 4
          %s545 = int_to_ptr.hbm [resolvable:$true] %s544
          %s546 = sshll.u32 [#allocation10], 4
          %s547 = int_to_ptr.vmem [resolvable:$true] %s546
          %552 = dma.hbm_to_vmem [thread:$0]  %s545, 512, %s547, [#allocation11], 128, 128, 8
        $region48: #{adversarial_net_forward.1} parent=11 // pred_fallthru
          _
        // Predicated region
        $region49: #{adversarial_net_forward.1} parent=11 // pred_check
          %p553 = pneg %p320
        $region50: #{adversarial_net_forward.1} parent=11 // pred_check_branch
          %555 = sbr.rel (%p553) target = $region52
        $region51: #{adversarial_net_forward.1} parent=11 // pred_region
          _
        $region52: #{adversarial_net_forward.1} parent=11 // pred_fallthru
          _
        // Predicated region
        $region53: #{adversarial_net_forward.1} parent=11 // pred_check
          %p556 = pneg %p341
        $region54: #{adversarial_net_forward.1} parent=11 // pred_check_branch
          %558 = sbr.rel (%p556) target = $region56
        $region55: #{adversarial_net_forward.1} parent=11 // pred_region
          %560 = vsyncadd [#allocation11], 0
          %s561 = sshll.u32 %s13, 4
          %s562 = int_to_ptr.hbm [resolvable:$true] %s561
          %s563 = sshll.u32 [#allocation12], 4
          %s564 = int_to_ptr.vmem [resolvable:$true] %s563
          %569 = dma.hbm_to_vmem [thread:$0]  %s562, 512, %s564, [#allocation11], 128, 128, 8
        $region56: #{adversarial_net_forward.1} parent=11 // pred_fallthru
          _
        // Predicated region
        $region57: #{adversarial_net_forward.1} parent=11 // pred_check
          %p570 = pneg %p362
        $region58: #{adversarial_net_forward.1} parent=11 // pred_check_branch
          %572 = sbr.rel (%p570) target = $region60
        $region59: #{adversarial_net_forward.1} parent=11 // pred_region
          _
        $region60: #{adversarial_net_forward.1} parent=11 // pred_fallthru
          _
        // Predicated region
        $region61: #{adversarial_net_forward.1} parent=11 // pred_check
          %p573 = pneg %p383
        $region62: #{adversarial_net_forward.1} parent=11 // pred_check_branch
          %575 = sbr.rel (%p573) target = $region64
        $region63: #{adversarial_net_forward.1} parent=11 // pred_region
          %577 = vsyncadd [#allocation14], 0
          %s578 = sshll.u32 %s15, 4
          %s579 = int_to_ptr.hbm [resolvable:$true] %s578
          %s580 = sshll.u32 [#allocation13], 4
          %s581 = int_to_ptr.vmem [resolvable:$true] %s580
          %586 = dma.hbm_to_vmem [thread:$0]  %s579, 512, %s581, [#allocation14], 128, 128, 8
        $region64: #{adversarial_net_forward.1} parent=11 // pred_fallthru
          _
        // Predicated region
        $region65: #{adversarial_net_forward.1} parent=11 // pred_check
          %p587 = pneg %p404
        $region66: #{adversarial_net_forward.1} parent=11 // pred_check_branch
          %589 = sbr.rel (%p587) target = $region68
        $region67: #{adversarial_net_forward.1} parent=11 // pred_region
          _
        $region68: #{adversarial_net_forward.1} parent=11 // pred_fallthru
          _
      $region12: #{adversarial_net_forward.1} parent=5 // pred_fallthru
        _
      %p590 = scmp.lt.s32.totalorder %s32, 2
      // Predicated region
      $region69: #{adversarial_net_forward.1} parent=5 // pred_check
        %p591 = pneg %p590
      $region70: #{adversarial_net_forward.1} parent=5 // pred_check_branch
        %593 = sbr.rel (%p591) target = $region72
      $region71: #{adversarial_net_forward.1} parent=5 // pred_region
        // Predicated region
        $region73: #{adversarial_net_forward.1} parent=71 // pred_check
          %p594 = pneg %p52
        $region74: #{adversarial_net_forward.1} parent=71 // pred_check_branch
          %596 = sbr.rel (%p594) target = $region76
        $region75: #{adversarial_net_forward.1} parent=71 // pred_region
          %p597 = scmp.lt.s32.totalorder %s32, 1
          %s598 = scalar_select %p597, %s32, 1
          %s599 = smul.addr %s598, 8
          %s600 = scalar_lea.vmem %s0, %s599
        $region76: #{adversarial_net_forward.1} parent=71 // pred_fallthru
          _
        // Predicated region
        $region77: #{adversarial_net_forward.1} parent=71 // pred_check
          %p601 = pneg %p78
        $region78: #{adversarial_net_forward.1} parent=71 // pred_check_branch
          %603 = sbr.rel (%p601) target = $region80
        $region79: #{adversarial_net_forward.1} parent=71 // pred_region
          %s604 = sand.u32 %s68, 1
          %s605 = scalar_lea.sflag [#allocation3], %s604
          %s606 = sand.u32 %s68, 1
          %s607 = smul.addr %s606, 8
          %s608 = scalar_lea.vmem [#allocation2], %s607
          %610 = vsyncadd %s605, 0
          %s611 = smul.addr %s32, 8
          %s612 = scalar_lea.hbm %s1, %s611
          %s614 = sshll.u32 %s612, 4
          %s615 = int_to_ptr.hbm [resolvable:$true] %s614
          %s616 = sshll.u32 %s608, 4
          %s617 = int_to_ptr.vmem [resolvable:$true] %s616
          %619 = dma.hbm_to_vmem [thread:$0]  %s615, 128, %s617, %s605
        $region80: #{adversarial_net_forward.1} parent=71 // pred_fallthru
          _
        // Predicated region
        $region81: #{adversarial_net_forward.1} parent=71 // pred_check
          %p620 = pneg %p104
        $region82: #{adversarial_net_forward.1} parent=71 // pred_check_branch
          %622 = sbr.rel (%p620) target = $region84
        $region83: #{adversarial_net_forward.1} parent=71 // pred_region
          %p623 = scmp.lt.s32.totalorder %s32, 1
          %s624 = scalar_select %p623, %s32, 1
          %s625 = smul.addr %s624, 8
          %s626 = scalar_lea.vmem %s2, %s625
        $region84: #{adversarial_net_forward.1} parent=71 // pred_fallthru
          _
      $region72: #{adversarial_net_forward.1} parent=5 // pred_fallthru
        _
      %p627 = scmp.le.s32.totalorder 1, %s32
      %p628 = scmp.lt.s32.totalorder %s32, 3
      %p629 = pnand %p627, %p628
      %p630 = pneg %p629
      // Predicated region
      $region85: #{adversarial_net_forward.1} parent=5 // pred_check
        _
      $region86: #{adversarial_net_forward.1} parent=5 // pred_check_branch
        %632 = sbr.rel (%p629) target = $region88
      $region87: #{adversarial_net_forward.1} parent=5 // pred_region
        %s633 = ssub.s32 %s32, 1
        %s634 = sand.u32 %s71, 1
        %s635 = scalar_lea.sflag [#allocation3], %s634
        %s636 = sand.u32 %s71, 1
        %s637 = smul.addr %s636, 8
        %s638 = scalar_lea.vmem [#allocation2], %s637
        // Predicated region
        $region89: #{adversarial_net_forward.1} parent=87 // pred_check
          %p639 = pneg %p84
        $region90: #{adversarial_net_forward.1} parent=87 // pred_check_branch
          %641 = sbr.rel (%p639) target = $region92
        $region91: #{adversarial_net_forward.1} parent=87 // pred_region
          %643 = dma.done %s635, 128
        $region92: #{adversarial_net_forward.1} parent=87 // pred_fallthru
          _
        // Predicated region
        $region93: #{adversarial_net_forward.1} parent=87 // pred_check
          %p644 = pneg %p131
        $region94: #{adversarial_net_forward.1} parent=87 // pred_check_branch
          %646 = sbr.rel (%p644) target = $region96
        $region95: #{adversarial_net_forward.1} parent=87 // pred_region
          %648 = dma.done [#allocation5], 512
        $region96: #{adversarial_net_forward.1} parent=87 // pred_fallthru
          _
        // Predicated region
        $region97: #{adversarial_net_forward.1} parent=87 // pred_check
          %p649 = pneg %p173
        $region98: #{adversarial_net_forward.1} parent=87 // pred_check_branch
          %651 = sbr.rel (%p649) target = $region100
        $region99: #{adversarial_net_forward.1} parent=87 // pred_region
          %653 = dma.done [#allocation5], 512
        $region100: #{adversarial_net_forward.1} parent=87 // pred_fallthru
          _
        // Predicated region
        $region101: #{adversarial_net_forward.1} parent=87 // pred_check
          %p654 = pneg %p215
        $region102: #{adversarial_net_forward.1} parent=87 // pred_check_branch
          %656 = sbr.rel (%p654) target = $region104
        $region103: #{adversarial_net_forward.1} parent=87 // pred_region
          %658 = dma.done [#allocation8], 512
        $region104: #{adversarial_net_forward.1} parent=87 // pred_fallthru
          _
        // Predicated region
        $region105: #{adversarial_net_forward.1} parent=87 // pred_check
          %p659 = pneg %p257
        $region106: #{adversarial_net_forward.1} parent=87 // pred_check_branch
          %661 = sbr.rel (%p659) target = $region108
        $region107: #{adversarial_net_forward.1} parent=87 // pred_region
          %663 = dma.done [#allocation8], 512
        $region108: #{adversarial_net_forward.1} parent=87 // pred_fallthru
          _
        // Predicated region
        $region109: #{adversarial_net_forward.1} parent=87 // pred_check
          %p664 = pneg %p299
        $region110: #{adversarial_net_forward.1} parent=87 // pred_check_branch
          %666 = sbr.rel (%p664) target = $region112
        $region111: #{adversarial_net_forward.1} parent=87 // pred_region
          %668 = dma.done [#allocation11], 512
        $region112: #{adversarial_net_forward.1} parent=87 // pred_fallthru
          _
        // Predicated region
        $region113: #{adversarial_net_forward.1} parent=87 // pred_check
          %p669 = pneg %p341
        $region114: #{adversarial_net_forward.1} parent=87 // pred_check_branch
          %671 = sbr.rel (%p669) target = $region116
        $region115: #{adversarial_net_forward.1} parent=87 // pred_region
          %673 = dma.done [#allocation11], 512
        $region116: #{adversarial_net_forward.1} parent=87 // pred_fallthru
          _
        // Predicated region
        $region117: #{adversarial_net_forward.1} parent=87 // pred_check
          %p674 = pneg %p383
        $region118: #{adversarial_net_forward.1} parent=87 // pred_check_branch
          %676 = sbr.rel (%p674) target = $region120
        $region119: #{adversarial_net_forward.1} parent=87 // pred_region
          %678 = dma.done [#allocation14], 512
        $region120: #{adversarial_net_forward.1} parent=87 // pred_fallthru
          _
        %p679 = scmp.lt.s32.totalorder %s37, 1
        %s680 = scalar_select %p679, %s37, 1
        %s681 = smul.addr %s680, 8
        %s682 = scalar_lea.vmem %s0, %s681
        %p683 = pneg %p58
        %p684 = pneg %p55
        %s685 = sand.u32 %s71, 1
        %s686 = scalar_lea.sflag [#allocation3], %s685
        %s687 = sand.u32 %s71, 1
        %s688 = smul.addr %s687, 8
        %s689 = scalar_lea.vmem [#allocation2], %s688
        %p690 = pneg %p84
        %p691 = pneg %p81
        %p692 = scmp.lt.s32.totalorder %s37, 1
        %s693 = scalar_select %p692, %s37, 1
        %s694 = smul.addr %s693, 8
        %s695 = scalar_lea.vmem %s2, %s694
        %p696 = pneg %p110
        %p697 = pneg %p107
        %p698 = pneg %p131
        %p699 = pneg %p128
        %p700 = pneg %p152
        %p701 = pneg %p149
        %p702 = pneg %p173
        %p703 = pneg %p170
        %p704 = pneg %p194
        %p705 = pneg %p191
        %p706 = pneg %p215
        %p707 = pneg %p212
        %p708 = pneg %p236
        %p709 = pneg %p233
        %p710 = pneg %p257
        %p711 = pneg %p254
        %p712 = pneg %p278
        %p713 = pneg %p275
        %p714 = pneg %p299
        %p715 = pneg %p296
        %p716 = pneg %p320
        %p717 = pneg %p317
        %p718 = pneg %p341
        %p719 = pneg %p338
        %p720 = pneg %p362
        %p721 = pneg %p359
        %p722 = pneg %p383
        %p723 = pneg %p380
        %p724 = pneg %p404
        %p725 = pneg %p401
        %p726 = pneg %p430
        %p727 = pneg %p427
        %p728 = scmp.lt.s32.totalorder %s37, 1
        %s729 = scalar_select %p728, %s37, 1
        %s730 = scalar_lea.vmem %s17, %s729
        %p731 = pneg %p456
        %p732 = pneg %p453
        %p733 = scmp.lt.s32.totalorder %s37, 1
        %s734 = scalar_select %p733, %s37, 1
        %s735 = scalar_lea.vmem %s18, %s734
        %p736 = scmp.lt.s32.totalorder %s37, 1
        %s737 = scalar_select %p736, %s37, 1
        %s738 = smul.addr %s737, 8
        %s739 = scalar_lea.vmem %s0, %s738
        %p740 = scmp.lt.s32.totalorder %s37, 1
        %s741 = scalar_select %p740, %s37, 1
        %s742 = smul.addr %s741, 8
        %s743 = scalar_lea.vmem %s2, %s742
        %p744 = scmp.lt.s32.totalorder %s37, 1
        %s745 = scalar_select %p744, %s37, 1
        %s746 = scalar_lea.vmem %s17, %s745
        %p747 = scmp.lt.s32.totalorder %s37, 1
        %s748 = scalar_select %p747, %s37, 1
        %s749 = scalar_lea.vmem %s18, %s748
        %v751 = vld [vmem:[%s739] sm:$0xff]
        %v752 = vld [vmem:[%s638] sm:$0xff]
        %v753 = vadd.f32 %v751, %v752
        %v754 = vmul.f32 %v753, 0.5
        %v755 = vld [vmem:[%s743] sm:$0xff]
        %vm756 = vcmp.eq.s32.totalorder %v755, 0
        %v757 = vsel %vm756, 1, 0
        %v758 = vcvt.s32.f32 %v757
        %vm759 = vcmp.eq.s32.totalorder %v755, 1
        %v760 = vsel %vm759, 1, 0
        %v761 = vcvt.s32.f32 %v760
        %763 = vset.pattern.permute.xlu0 0
        %764 = vperm.xlu0 %763, %v758
        %v765 = vpop.permute.xlu0 %764
        %v767 = vmul.f32 %v765, %v754
        %769 = vset.pattern.permute.xlu0 0
        %770 = vperm.xlu0 %769, %v761
        %v771 = vpop.permute.xlu0 %770
        %v773 = vmul.f32 %v771, %v754
        %v774 = vpack.c.bf16 %v767, %v767
        %v775 = vld [vmem:[#allocation6] sm:$0xff]
        %v776 = vld [vmem:[#allocation6 + $0x8] sm:$0xff]
        %v777 = vld [vmem:[#allocation6 + $0x10] sm:$0xff]
        %v778 = vld [vmem:[#allocation6 + $0x18] sm:$0xff]
        %v779 = vpack.c.bf16 %v776, %v775
        %v780 = vpack.c.bf16 %v778, %v777
        %v781 = vld [vmem:[%s6] sm:$0x1]
        %v783 = vperm.slane %v781, 0
        %vm785 = vcmask 261120
        %v787 = vsel %vm785, %v774, 0
        %789 = vmatpush.bf16.msra.mxu0 0
        %790 = vmatpush.bf16.msra.mxu0 0
        %791 = vmatpush.bf16.msra.mxu0 0
        %792 = vmatpush.bf16.msra.mxu0 0
        %793 = vmatpush.bf16.msra.mxu0 0
        %794 = vmatpush.bf16.msra.mxu0 0
        %795 = vmatpush.bf16.msra.mxu0 %v780
        %796 = vmatpush.bf16.msra.mxu0 %v779
        %797 = vmatmul.bf16.gmra.mxu0 %v787
        %v798 = vpop.f32.mrf.mxu0
        %v799 = vadd.f32 %v783, %v798
        %v800 = vpop.f32.mrf.mxu0
        %801 = vdwg.mxu0
        %v802 = vld [vmem:[#allocation7] sm:$0xff]
        %v803 = vld [vmem:[#allocation7 + $0x8] sm:$0xff]
        %v804 = vld [vmem:[#allocation7 + $0x10] sm:$0xff]
        %v805 = vld [vmem:[#allocation7 + $0x18] sm:$0xff]
        %v806 = vpack.c.bf16 %v803, %v802
        %v807 = vpack.c.bf16 %v805, %v804
        %v808 = vld [vmem:[%s8] sm:$0x1]
        %v810 = vperm.slane %v808, 0
        %812 = vmatpush.bf16.msra.mxu0 0
        %813 = vmatpush.bf16.msra.mxu0 0
        %814 = vmatpush.bf16.msra.mxu0 0
        %815 = vmatpush.bf16.msra.mxu0 0
        %816 = vmatpush.bf16.msra.mxu0 0
        %817 = vmatpush.bf16.msra.mxu0 0
        %818 = vmatpush.bf16.msra.mxu0 %v807
        %819 = vmatpush.bf16.msra.mxu0 %v806
        %820 = vmatmul.bf16.gmra.mxu0 %v787
        %v821 = vpop.f32.mrf.mxu0
        %v822 = vadd.f32 %v810, %v821
        %v823 = vpop.f32.mrf.mxu0
        %824 = vdwg.mxu0
        %v825 = vpack.c.bf16 %v773, %v773
        %v826 = vld [vmem:[#allocation4] sm:$0xff]
        %v827 = vld [vmem:[#allocation4 + $0x8] sm:$0xff]
        %v828 = vld [vmem:[#allocation4 + $0x10] sm:$0xff]
        %v829 = vld [vmem:[#allocation4 + $0x18] sm:$0xff]
        %v830 = vpack.c.bf16 %v827, %v826
        %v831 = vpack.c.bf16 %v829, %v828
        %v832 = vld [vmem:[%s4] sm:$0x1]
        %v834 = vperm.slane %v832, 0
        %v837 = vsel %vm785, %v825, 0
        %839 = vmatpush.bf16.msra.mxu0 0
        %840 = vmatpush.bf16.msra.mxu0 0
        %841 = vmatpush.bf16.msra.mxu0 0
        %842 = vmatpush.bf16.msra.mxu0 0
        %843 = vmatpush.bf16.msra.mxu0 0
        %844 = vmatpush.bf16.msra.mxu0 0
        %845 = vmatpush.bf16.msra.mxu0 %v831
        %846 = vmatpush.bf16.msra.mxu0 %v830
        %847 = vmatmul.bf16.gmra.mxu0 %v837
        %v848 = vpop.f32.mrf.mxu0
        %v849 = vadd.f32 %v834, %v848
        %v850 = vpop.f32.mrf.mxu0
        %851 = vdwg.mxu0
        %v852 = vpack.c.bf16 %v849, %v849
        %v853 = vld [vmem:[#allocation9] sm:$0xff]
        %v854 = vld [vmem:[#allocation9 + $0x8] sm:$0xff]
        %v855 = vld [vmem:[#allocation9 + $0x10] sm:$0xff]
        %v856 = vld [vmem:[#allocation9 + $0x18] sm:$0xff]
        %v857 = vpack.c.bf16 %v854, %v853
        %v858 = vpack.c.bf16 %v856, %v855
        %v859 = vld [vmem:[%s10] sm:$0x1]
        %v861 = vperm.slane %v859, 0
        %v864 = vsel %vm785, %v852, 0
        %866 = vmatpush.bf16.msra.mxu0 0
        %867 = vmatpush.bf16.msra.mxu0 0
        %868 = vmatpush.bf16.msra.mxu0 0
        %869 = vmatpush.bf16.msra.mxu0 0
        %870 = vmatpush.bf16.msra.mxu0 0
        %871 = vmatpush.bf16.msra.mxu0 0
        %872 = vmatpush.bf16.msra.mxu0 %v858
        %873 = vmatpush.bf16.msra.mxu0 %v857
        %874 = vmatmul.bf16.gmra.mxu0 %v864
        %v875 = vpop.f32.mrf.mxu0
        %v876 = vadd.f32 %v861, %v875
        %v877 = vpop.f32.mrf.mxu0
        %878 = vdwg.mxu0
        %v879 = vpack.c.bf16 %v876, %v876
        %v880 = vpack.c.bf16 %v799, %v799
        %v881 = vld [vmem:[#allocation10] sm:$0xff]
        %v882 = vld [vmem:[#allocation10 + $0x8] sm:$0xff]
        %v883 = vld [vmem:[#allocation10 + $0x10] sm:$0xff]
        %v884 = vld [vmem:[#allocation10 + $0x18] sm:$0xff]
        %v885 = vpack.c.bf16 %v882, %v881
        %v886 = vpack.c.bf16 %v884, %v883
        %v887 = vld [vmem:[%s12] sm:$0x1]
        %v889 = vperm.slane %v887, 0
        %v892 = vsel %vm785, %v880, 0
        %894 = vmatpush.bf16.msra.mxu0 0
        %895 = vmatpush.bf16.msra.mxu0 0
        %896 = vmatpush.bf16.msra.mxu0 0
        %897 = vmatpush.bf16.msra.mxu0 0
        %898 = vmatpush.bf16.msra.mxu0 0
        %899 = vmatpush.bf16.msra.mxu0 0
        %900 = vmatpush.bf16.msra.mxu0 %v886
        %901 = vmatpush.bf16.msra.mxu0 %v885
        %902 = vmatmul.bf16.gmra.mxu0 %v892
        %v903 = vpop.f32.mrf.mxu0
        %v904 = vadd.f32 %v889, %v903
        %v905 = vpop.f32.mrf.mxu0
        %906 = vdwg.mxu0
        %v907 = vpack.c.bf16 %v904, %v904
        %v908 = vpack.c.bf16 %v822, %v822
        %v909 = vld [vmem:[#allocation12] sm:$0xff]
        %v910 = vld [vmem:[#allocation12 + $0x8] sm:$0xff]
        %v911 = vld [vmem:[#allocation12 + $0x10] sm:$0xff]
        %v912 = vld [vmem:[#allocation12 + $0x18] sm:$0xff]
        %v913 = vpack.c.bf16 %v910, %v909
        %v914 = vpack.c.bf16 %v912, %v911
        %v915 = vld [vmem:[%s14] sm:$0x1]
        %v917 = vperm.slane %v915, 0
        %v920 = vsel %vm785, %v908, 0
        %922 = vmatpush.bf16.msra.mxu0 0
        %923 = vmatpush.bf16.msra.mxu0 0
        %924 = vmatpush.bf16.msra.mxu0 0
        %925 = vmatpush.bf16.msra.mxu0 0
        %926 = vmatpush.bf16.msra.mxu0 0
        %927 = vmatpush.bf16.msra.mxu0 0
        %928 = vmatpush.bf16.msra.mxu0 %v914
        %929 = vmatpush.bf16.msra.mxu0 %v913
        %930 = vmatmul.bf16.gmra.mxu0 %v920
        %v931 = vpop.f32.mrf.mxu0
        %v932 = vadd.f32 %v917, %v931
        %v933 = vpop.f32.mrf.mxu0
        %934 = vdwg.mxu0
        %v935 = vpack.c.bf16 %v932, %v932
        %vm936 = vcmask 31744
        %v938 = vsel %vm936, %v879, 0
        %v941 = vsel %vm936, %v907, 0
        %943 = vmatpush.bf16.xpose.msra.mxu0 0
        %944 = vmatpush.bf16.xpose.msra.mxu0 0
        %945 = vmatpush.bf16.xpose.msra.mxu0 0
        %946 = vmatpush.bf16.xpose.msra.mxu0 0
        %947 = vmatpush.bf16.xpose.msra.mxu0 0
        %948 = vmatpush.bf16.xpose.msra.mxu0 0
        %949 = vmatpush.bf16.xpose.msra.mxu0 0
        %950 = vmatpush.bf16.xpose.msra.mxu0 %v941
        %951 = vmatmul.bf16.gmra.mxu0 %v938
        %v952 = vpop.f32.mrf.mxu0
        %v953 = vadd.f32 0.0, %v952
        %v954 = vpop.f32.mrf.mxu0
        %955 = vdwg.mxu0
        %v956 = vmul.f32 %v953, 0.5
        %vm957 = vcmask 64512
        %v958 = vsel %vm957, %v956, -inf
        %959 = vmax.xlane.f32.xlu0 %v958
        %v960 = vpop.xlane.xlu0 %959
        %v961 = vsub.f32 %v956, %v960
        %v962 = vmul.f32 %v961, 1.442695
        %v963 = vpow.pop %v962
        %v964 = vsel %vm957, %v963, 0.0
        %965 = vadd.xlane.f32.xlu0 %v964
        %v966 = vpop.xlane.xlu0 %965
        %v967 = vrcp.pop %v966
        %v968 = vmul.f32 %v963, %v967
        %v969 = vpack.c.bf16 %v968, %v968
        %v971 = vsel %vm957, %v969, 0
        %vm973 = vcmask 1043456
        %v975 = vsel %vm973, %v935, 0
        %977 = vmatpush.bf16.msra.mxu0 0
        %978 = vmatpush.bf16.msra.mxu0 0
        %979 = vmatpush.bf16.msra.mxu0 0
        %980 = vmatpush.bf16.msra.mxu0 0
        %981 = vmatpush.bf16.msra.mxu0 0
        %982 = vmatpush.bf16.msra.mxu0 0
        %983 = vmatpush.bf16.msra.mxu0 0
        %984 = vmatpush.bf16.msra.mxu0 %v975
        %985 = vmatmul.bf16.gmra.mxu0 %v971
        %v986 = vpop.f32.mrf.mxu0
        %v987 = vadd.f32 0.0, %v986
        %v988 = vpop.f32.mrf.mxu0
        %989 = vdwg.mxu0
        %v991 = vunpack.c.l.b16 %v879
        %v992 = vpack.c.b16 %v991, %v991
        %993 = vrot.lane.b32.xlu0 %v992, 124
        %v994 = vpop.permute.xlu0 %993
        %v996 = vunpack.c.l.b16 %v907
        %v997 = vpack.c.b16 %v996, %v996
        %998 = vrot.lane.b32.xlu0 %v997, 124
        %v999 = vpop.permute.xlu0 %998
        %v1001 = vsel %vm936, %v994, 0
        %v1004 = vsel %vm936, %v999, 0
        %1006 = vmatpush.bf16.xpose.msra.mxu0 0
        %1007 = vmatpush.bf16.xpose.msra.mxu0 0
        %1008 = vmatpush.bf16.xpose.msra.mxu0 0
        %1009 = vmatpush.bf16.xpose.msra.mxu0 0
        %1010 = vmatpush.bf16.xpose.msra.mxu0 0
        %1011 = vmatpush.bf16.xpose.msra.mxu0 0
        %1012 = vmatpush.bf16.xpose.msra.mxu0 0
        %1013 = vmatpush.bf16.xpose.msra.mxu0 %v1004
        %1014 = vmatmul.bf16.gmra.mxu0 %v1001
        %v1015 = vpop.f32.mrf.mxu0
        %v1016 = vadd.f32 0.0, %v1015
        %v1017 = vpop.f32.mrf.mxu0
        %1018 = vdwg.mxu0
        %v1019 = vmul.f32 %v1016, 0.5
        %v1020 = vsel %vm957, %v1019, -inf
        %1021 = vmax.xlane.f32.xlu0 %v1020
        %v1022 = vpop.xlane.xlu0 %1021
        %v1023 = vsub.f32 %v1019, %v1022
        %v1024 = vmul.f32 %v1023, 1.442695
        %v1025 = vpow.pop %v1024
        %v1026 = vsel %vm957, %v1025, 0.0
        %1027 = vadd.xlane.f32.xlu0 %v1026
        %v1028 = vpop.xlane.xlu0 %1027
        %v1029 = vrcp.pop %v1028
        %v1030 = vmul.f32 %v1025, %v1029
        %v1031 = vpack.c.bf16 %v1030, %v1030
        %v1033 = vunpack.c.l.b16 %v935
        %v1034 = vpack.c.b16 %v1033, %v1033
        %1035 = vrot.lane.b32.xlu0 %v1034, 124
        %v1036 = vpop.permute.xlu0 %1035
        %v1038 = vsel %vm957, %v1031, 0
        %v1041 = vsel %vm973, %v1036, 0
        %1043 = vmatpush.bf16.msra.mxu0 0
        %1044 = vmatpush.bf16.msra.mxu0 0
        %1045 = vmatpush.bf16.msra.mxu0 0
        %1046 = vmatpush.bf16.msra.mxu0 0
        %1047 = vmatpush.bf16.msra.mxu0 0
        %1048 = vmatpush.bf16.msra.mxu0 0
        %1049 = vmatpush.bf16.msra.mxu0 0
        %1050 = vmatpush.bf16.msra.mxu0 %v1041
        %1051 = vmatmul.bf16.gmra.mxu0 %v1038
        %v1052 = vpop.f32.mrf.mxu0
        %v1053 = vadd.f32 0.0, %v1052
        %v1054 = vpop.f32.mrf.mxu0
        %1055 = vdwg.mxu0
        %1056 = vrot.lane.b32.xlu0 %v992, 120
        %v1057 = vpop.permute.xlu0 %1056
        %1058 = vrot.lane.b32.xlu0 %v997, 120
        %v1059 = vpop.permute.xlu0 %1058
        %v1061 = vsel %vm936, %v1057, 0
        %v1064 = vsel %vm936, %v1059, 0
        %1066 = vmatpush.bf16.xpose.msra.mxu0 0
        %1067 = vmatpush.bf16.xpose.msra.mxu0 0
        %1068 = vmatpush.bf16.xpose.msra.mxu0 0
        %1069 = vmatpush.bf16.xpose.msra.mxu0 0
        %1070 = vmatpush.bf16.xpose.msra.mxu0 0
        %1071 = vmatpush.bf16.xpose.msra.mxu0 0
        %1072 = vmatpush.bf16.xpose.msra.mxu0 0
        %1073 = vmatpush.bf16.xpose.msra.mxu0 %v1064
        %1074 = vmatmul.bf16.gmra.mxu0 %v1061
        %v1075 = vpop.f32.mrf.mxu0
        %v1076 = vadd.f32 0.0, %v1075
        %v1077 = vpop.f32.mrf.mxu0
        %1078 = vdwg.mxu0
        %v1079 = vmul.f32 %v1076, 0.5
        %v1080 = vsel %vm957, %v1079, -inf
        %1081 = vmax.xlane.f32.xlu0 %v1080
        %v1082 = vpop.xlane.xlu0 %1081
        %v1083 = vsub.f32 %v1079, %v1082
        %v1084 = vmul.f32 %v1083, 1.442695
        %v1085 = vpow.pop %v1084
        %v1086 = vsel %vm957, %v1085, 0.0
        %1087 = vadd.xlane.f32.xlu0 %v1086
        %v1088 = vpop.xlane.xlu0 %1087
        %v1089 = vrcp.pop %v1088
        %v1090 = vmul.f32 %v1085, %v1089
        %v1091 = vpack.c.bf16 %v1090, %v1090
        %1092 = vrot.lane.b32.xlu0 %v1034, 120
        %v1093 = vpop.permute.xlu0 %1092
        %v1095 = vsel %vm957, %v1091, 0
        %v1098 = vsel %vm973, %v1093, 0
        %1100 = vmatpush.bf16.msra.mxu0 0
        %1101 = vmatpush.bf16.msra.mxu0 0
        %1102 = vmatpush.bf16.msra.mxu0 0
        %1103 = vmatpush.bf16.msra.mxu0 0
        %1104 = vmatpush.bf16.msra.mxu0 0
        %1105 = vmatpush.bf16.msra.mxu0 0
        %1106 = vmatpush.bf16.msra.mxu0 0
        %1107 = vmatpush.bf16.msra.mxu0 %v1098
        %1108 = vmatmul.bf16.gmra.mxu0 %v1095
        %v1109 = vpop.f32.mrf.mxu0
        %v1110 = vadd.f32 0.0, %v1109
        %v1111 = vpop.f32.mrf.mxu0
        %1112 = vdwg.mxu0
        %1113 = vrot.lane.b32.xlu0 %v992, 116
        %v1114 = vpop.permute.xlu0 %1113
        %1115 = vrot.lane.b32.xlu0 %v997, 116
        %v1116 = vpop.permute.xlu0 %1115
        %v1118 = vsel %vm936, %v1114, 0
        %v1121 = vsel %vm936, %v1116, 0
        %1123 = vmatpush.bf16.xpose.msra.mxu0 0
        %1124 = vmatpush.bf16.xpose.msra.mxu0 0
        %1125 = vmatpush.bf16.xpose.msra.mxu0 0
        %1126 = vmatpush.bf16.xpose.msra.mxu0 0
        %1127 = vmatpush.bf16.xpose.msra.mxu0 0
        %1128 = vmatpush.bf16.xpose.msra.mxu0 0
        %1129 = vmatpush.bf16.xpose.msra.mxu0 0
        %1130 = vmatpush.bf16.xpose.msra.mxu0 %v1121
        %1131 = vmatmul.bf16.gmra.mxu0 %v1118
        %v1132 = vpop.f32.mrf.mxu0
        %v1133 = vadd.f32 0.0, %v1132
        %v1134 = vpop.f32.mrf.mxu0
        %1135 = vdwg.mxu0
        %v1136 = vmul.f32 %v1133, 0.5
        %v1137 = vsel %vm957, %v1136, -inf
        %1138 = vmax.xlane.f32.xlu0 %v1137
        %v1139 = vpop.xlane.xlu0 %1138
        %v1140 = vsub.f32 %v1136, %v1139
        %v1141 = vmul.f32 %v1140, 1.442695
        %v1142 = vpow.pop %v1141
        %v1143 = vsel %vm957, %v1142, 0.0
        %1144 = vadd.xlane.f32.xlu0 %v1143
        %v1145 = vpop.xlane.xlu0 %1144
        %v1146 = vrcp.pop %v1145
        %v1147 = vmul.f32 %v1142, %v1146
        %v1148 = vpack.c.bf16 %v1147, %v1147
        %1149 = vrot.lane.b32.xlu0 %v1034, 116
        %v1150 = vpop.permute.xlu0 %1149
        %v1152 = vsel %vm957, %v1148, 0
        %v1155 = vsel %vm973, %v1150, 0
        %1157 = vmatpush.bf16.msra.mxu0 0
        %1158 = vmatpush.bf16.msra.mxu0 0
        %1159 = vmatpush.bf16.msra.mxu0 0
        %1160 = vmatpush.bf16.msra.mxu0 0
        %1161 = vmatpush.bf16.msra.mxu0 0
        %1162 = vmatpush.bf16.msra.mxu0 0
        %1163 = vmatpush.bf16.msra.mxu0 0
        %1164 = vmatpush.bf16.msra.mxu0 %v1155
        %1165 = vmatmul.bf16.gmra.mxu0 %v1152
        %v1166 = vpop.f32.mrf.mxu0
        %v1167 = vadd.f32 0.0, %v1166
        %v1168 = vpop.f32.mrf.mxu0
        %1169 = vdwg.mxu0
        %1170 = vrot.lane.b32.xlu0 %v992, 112
        %v1171 = vpop.permute.xlu0 %1170
        %1172 = vrot.lane.b32.xlu0 %v997, 112
        %v1173 = vpop.permute.xlu0 %1172
        %v1175 = vsel %vm936, %v1171, 0
        %v1178 = vsel %vm936, %v1173, 0
        %1180 = vmatpush.bf16.xpose.msra.mxu0 0
        %1181 = vmatpush.bf16.xpose.msra.mxu0 0
        %1182 = vmatpush.bf16.xpose.msra.mxu0 0
        %1183 = vmatpush.bf16.xpose.msra.mxu0 0
        %1184 = vmatpush.bf16.xpose.msra.mxu0 0
        %1185 = vmatpush.bf16.xpose.msra.mxu0 0
        %1186 = vmatpush.bf16.xpose.msra.mxu0 0
        %1187 = vmatpush.bf16.xpose.msra.mxu0 %v1178
        %1188 = vmatmul.bf16.gmra.mxu0 %v1175
        %v1189 = vpop.f32.mrf.mxu0
        %v1190 = vadd.f32 0.0, %v1189
        %v1191 = vpop.f32.mrf.mxu0
        %1192 = vdwg.mxu0
        %v1193 = vmul.f32 %v1190, 0.5
        %v1194 = vsel %vm957, %v1193, -inf
        %1195 = vmax.xlane.f32.xlu0 %v1194
        %v1196 = vpop.xlane.xlu0 %1195
        %v1197 = vsub.f32 %v1193, %v1196
        %v1198 = vmul.f32 %v1197, 1.442695
        %v1199 = vpow.pop %v1198
        %v1200 = vsel %vm957, %v1199, 0.0
        %1201 = vadd.xlane.f32.xlu0 %v1200
        %v1202 = vpop.xlane.xlu0 %1201
        %v1203 = vrcp.pop %v1202
        %v1204 = vmul.f32 %v1199, %v1203
        %v1205 = vpack.c.bf16 %v1204, %v1204
        %1206 = vrot.lane.b32.xlu0 %v1034, 112
        %v1207 = vpop.permute.xlu0 %1206
        %v1209 = vsel %vm957, %v1205, 0
        %v1212 = vsel %vm973, %v1207, 0
        %1214 = vmatpush.bf16.msra.mxu0 0
        %1215 = vmatpush.bf16.msra.mxu0 0
        %1216 = vmatpush.bf16.msra.mxu0 0
        %1217 = vmatpush.bf16.msra.mxu0 0
        %1218 = vmatpush.bf16.msra.mxu0 0
        %1219 = vmatpush.bf16.msra.mxu0 0
        %1220 = vmatpush.bf16.msra.mxu0 0
        %1221 = vmatpush.bf16.msra.mxu0 %v1212
        %1222 = vmatmul.bf16.gmra.mxu0 %v1209
        %v1223 = vpop.f32.mrf.mxu0
        %v1224 = vadd.f32 0.0, %v1223
        %v1225 = vpop.f32.mrf.mxu0
        %1226 = vdwg.mxu0
        %1227 = vrot.lane.b32.xlu0 %v992, 108
        %v1228 = vpop.permute.xlu0 %1227
        %1229 = vrot.lane.b32.xlu0 %v997, 108
        %v1230 = vpop.permute.xlu0 %1229
        %v1232 = vsel %vm936, %v1228, 0
        %v1235 = vsel %vm936, %v1230, 0
        %1237 = vmatpush.bf16.xpose.msra.mxu0 0
        %1238 = vmatpush.bf16.xpose.msra.mxu0 0
        %1239 = vmatpush.bf16.xpose.msra.mxu0 0
        %1240 = vmatpush.bf16.xpose.msra.mxu0 0
        %1241 = vmatpush.bf16.xpose.msra.mxu0 0
        %1242 = vmatpush.bf16.xpose.msra.mxu0 0
        %1243 = vmatpush.bf16.xpose.msra.mxu0 0
        %1244 = vmatpush.bf16.xpose.msra.mxu0 %v1235
        %1245 = vmatmul.bf16.gmra.mxu0 %v1232
        %v1246 = vpop.f32.mrf.mxu0
        %v1247 = vadd.f32 0.0, %v1246
        %v1248 = vpop.f32.mrf.mxu0
        %1249 = vdwg.mxu0
        %v1250 = vmul.f32 %v1247, 0.5
        %v1251 = vsel %vm957, %v1250, -inf
        %1252 = vmax.xlane.f32.xlu0 %v1251
        %v1253 = vpop.xlane.xlu0 %1252
        %v1254 = vsub.f32 %v1250, %v1253
        %v1255 = vmul.f32 %v1254, 1.442695
        %v1256 = vpow.pop %v1255
        %v1257 = vsel %vm957, %v1256, 0.0
        %1258 = vadd.xlane.f32.xlu0 %v1257
        %v1259 = vpop.xlane.xlu0 %1258
        %v1260 = vrcp.pop %v1259
        %v1261 = vmul.f32 %v1256, %v1260
        %v1262 = vpack.c.bf16 %v1261, %v1261
        %1263 = vrot.lane.b32.xlu0 %v1034, 108
        %v1264 = vpop.permute.xlu0 %1263
        %v1266 = vsel %vm957, %v1262, 0
        %v1269 = vsel %vm973, %v1264, 0
        %1271 = vmatpush.bf16.msra.mxu0 0
        %1272 = vmatpush.bf16.msra.mxu0 0
        %1273 = vmatpush.bf16.msra.mxu0 0
        %1274 = vmatpush.bf16.msra.mxu0 0
        %1275 = vmatpush.bf16.msra.mxu0 0
        %1276 = vmatpush.bf16.msra.mxu0 0
        %1277 = vmatpush.bf16.msra.mxu0 0
        %1278 = vmatpush.bf16.msra.mxu0 %v1269
        %1279 = vmatmul.bf16.gmra.mxu0 %v1266
        %v1280 = vpop.f32.mrf.mxu0
        %v1281 = vadd.f32 0.0, %v1280
        %v1282 = vpop.f32.mrf.mxu0
        %1283 = vdwg.mxu0
        %1284 = vrot.lane.b32.xlu0 %v992, 104
        %v1285 = vpop.permute.xlu0 %1284
        %1286 = vrot.lane.b32.xlu0 %v997, 104
        %v1287 = vpop.permute.xlu0 %1286
        %v1289 = vsel %vm936, %v1285, 0
        %v1292 = vsel %vm936, %v1287, 0
        %1294 = vmatpush.bf16.xpose.msra.mxu0 0
        %1295 = vmatpush.bf16.xpose.msra.mxu0 0
        %1296 = vmatpush.bf16.xpose.msra.mxu0 0
        %1297 = vmatpush.bf16.xpose.msra.mxu0 0
        %1298 = vmatpush.bf16.xpose.msra.mxu0 0
        %1299 = vmatpush.bf16.xpose.msra.mxu0 0
        %1300 = vmatpush.bf16.xpose.msra.mxu0 0
        %1301 = vmatpush.bf16.xpose.msra.mxu0 %v1292
        %1302 = vmatmul.bf16.gmra.mxu0 %v1289
        %v1303 = vpop.f32.mrf.mxu0
        %v1304 = vadd.f32 0.0, %v1303
        %v1305 = vpop.f32.mrf.mxu0
        %1306 = vdwg.mxu0
        %v1307 = vmul.f32 %v1304, 0.5
        %v1308 = vsel %vm957, %v1307, -inf
        %1309 = vmax.xlane.f32.xlu0 %v1308
        %v1310 = vpop.xlane.xlu0 %1309
        %v1311 = vsub.f32 %v1307, %v1310
        %v1312 = vmul.f32 %v1311, 1.442695
        %v1313 = vpow.pop %v1312
        %v1314 = vsel %vm957, %v1313, 0.0
        %1315 = vadd.xlane.f32.xlu0 %v1314
        %v1316 = vpop.xlane.xlu0 %1315
        %v1317 = vrcp.pop %v1316
        %v1318 = vmul.f32 %v1313, %v1317
        %v1319 = vpack.c.bf16 %v1318, %v1318
        %1320 = vrot.lane.b32.xlu0 %v1034, 104
        %v1321 = vpop.permute.xlu0 %1320
        %v1323 = vsel %vm957, %v1319, 0
        %v1326 = vsel %vm973, %v1321, 0
        %1328 = vmatpush.bf16.msra.mxu0 0
        %1329 = vmatpush.bf16.msra.mxu0 0
        %1330 = vmatpush.bf16.msra.mxu0 0
        %1331 = vmatpush.bf16.msra.mxu0 0
        %1332 = vmatpush.bf16.msra.mxu0 0
        %1333 = vmatpush.bf16.msra.mxu0 0
        %1334 = vmatpush.bf16.msra.mxu0 0
        %1335 = vmatpush.bf16.msra.mxu0 %v1326
        %1336 = vmatmul.bf16.gmra.mxu0 %v1323
        %v1337 = vpop.f32.mrf.mxu0
        %v1338 = vadd.f32 0.0, %v1337
        %v1339 = vpop.f32.mrf.mxu0
        %1340 = vdwg.mxu0
        %1341 = vrot.lane.b32.xlu0 %v992, 100
        %v1342 = vpop.permute.xlu0 %1341
        %1343 = vrot.lane.b32.xlu0 %v997, 100
        %v1344 = vpop.permute.xlu0 %1343
        %v1346 = vsel %vm936, %v1342, 0
        %v1349 = vsel %vm936, %v1344, 0
        %1351 = vmatpush.bf16.xpose.msra.mxu0 0
        %1352 = vmatpush.bf16.xpose.msra.mxu0 0
        %1353 = vmatpush.bf16.xpose.msra.mxu0 0
        %1354 = vmatpush.bf16.xpose.msra.mxu0 0
        %1355 = vmatpush.bf16.xpose.msra.mxu0 0
        %1356 = vmatpush.bf16.xpose.msra.mxu0 0
        %1357 = vmatpush.bf16.xpose.msra.mxu0 0
        %1358 = vmatpush.bf16.xpose.msra.mxu0 %v1349
        %1359 = vmatmul.bf16.gmra.mxu0 %v1346
        %v1360 = vpop.f32.mrf.mxu0
        %v1361 = vadd.f32 0.0, %v1360
        %v1362 = vpop.f32.mrf.mxu0
        %1363 = vdwg.mxu0
        %v1364 = vmul.f32 %v1361, 0.5
        %v1365 = vsel %vm957, %v1364, -inf
        %1366 = vmax.xlane.f32.xlu0 %v1365
        %v1367 = vpop.xlane.xlu0 %1366
        %v1368 = vsub.f32 %v1364, %v1367
        %v1369 = vmul.f32 %v1368, 1.442695
        %v1370 = vpow.pop %v1369
        %v1371 = vsel %vm957, %v1370, 0.0
        %1372 = vadd.xlane.f32.xlu0 %v1371
        %v1373 = vpop.xlane.xlu0 %1372
        %v1374 = vrcp.pop %v1373
        %v1375 = vmul.f32 %v1370, %v1374
        %v1376 = vpack.c.bf16 %v1375, %v1375
        %1377 = vrot.lane.b32.xlu0 %v1034, 100
        %v1378 = vpop.permute.xlu0 %1377
        %v1380 = vsel %vm957, %v1376, 0
        %v1383 = vsel %vm973, %v1378, 0
        %1385 = vmatpush.bf16.msra.mxu0 0
        %1386 = vmatpush.bf16.msra.mxu0 0
        %1387 = vmatpush.bf16.msra.mxu0 0
        %1388 = vmatpush.bf16.msra.mxu0 0
        %1389 = vmatpush.bf16.msra.mxu0 0
        %1390 = vmatpush.bf16.msra.mxu0 0
        %1391 = vmatpush.bf16.msra.mxu0 0
        %1392 = vmatpush.bf16.msra.mxu0 %v1383
        %1393 = vmatmul.bf16.gmra.mxu0 %v1380
        %v1394 = vpop.f32.mrf.mxu0
        %v1395 = vadd.f32 0.0, %v1394
        %v1396 = vpop.f32.mrf.mxu0
        %1397 = vdwg.mxu0
        %1399 = vrot.lane.b32.xlu0 %v1053, 4
        %v1400 = vpop.permute.xlu0 %1399
        %1403 = vrot.lane.b32.xlu0 %v1110, 8
        %v1404 = vpop.permute.xlu0 %1403
        %1407 = vrot.lane.b32.xlu0 %v1167, 12
        %v1408 = vpop.permute.xlu0 %1407
        %1411 = vrot.lane.b32.xlu0 %v1224, 16
        %v1412 = vpop.permute.xlu0 %1411
        %1415 = vrot.lane.b32.xlu0 %v1281, 20
        %v1416 = vpop.permute.xlu0 %1415
        %1419 = vrot.lane.b32.xlu0 %v1338, 24
        %v1420 = vpop.permute.xlu0 %1419
        %1423 = vrot.lane.b32.xlu0 %v1395, 28
        %v1424 = vpop.permute.xlu0 %1423
        %v1426 = vsel %vm936, %v987, %v1400
        %v1427 = vsel %vm957, %v1426, %v1404
        %vm1428 = vcmask 97280
        %v1429 = vsel %vm1428, %v1427, %v1408
        %vm1430 = vcmask 130048
        %v1431 = vsel %vm1430, %v1429, %v1412
        %vm1432 = vcmask 162816
        %v1433 = vsel %vm1432, %v1431, %v1416
        %vm1434 = vcmask 195584
        %v1435 = vsel %vm1434, %v1433, %v1420
        %vm1436 = vcmask 228352
        %v1437 = vsel %vm1436, %v1435, %v1424
        %v1438 = vpack.c.bf16 %v1437, %v1437
        %v1439 = vld [vmem:[#allocation13] sm:$0xff]
        %v1440 = vld [vmem:[#allocation13 + $0x8] sm:$0xff]
        %v1441 = vld [vmem:[#allocation13 + $0x10] sm:$0xff]
        %v1442 = vld [vmem:[#allocation13 + $0x18] sm:$0xff]
        %v1443 = vpack.c.bf16 %v1440, %v1439
        %v1444 = vpack.c.bf16 %v1442, %v1441
        %v1445 = vld [vmem:[%s16] sm:$0x1]
        %v1447 = vperm.slane %v1445, 0
        %v1450 = vsel %vm785, %v1438, 0
        %1452 = vmatpush.bf16.msra.mxu0 0
        %1453 = vmatpush.bf16.msra.mxu0 0
        %1454 = vmatpush.bf16.msra.mxu0 0
        %1455 = vmatpush.bf16.msra.mxu0 0
        %1456 = vmatpush.bf16.msra.mxu0 0
        %1457 = vmatpush.bf16.msra.mxu0 0
        %1458 = vmatpush.bf16.msra.mxu0 %v1444
        %1459 = vmatpush.bf16.msra.mxu0 %v1443
        %1460 = vmatmul.bf16.gmra.mxu0 %v1450
        %v1461 = vpop.f32.mrf.mxu0
        %v1462 = vadd.f32 %v1447, %v1461
        %v1463 = vpop.f32.mrf.mxu0
        %1464 = vdwg.mxu0
        %v1465 = vsel %vm785, %v1462, 0.0
        %v1466 = vrot.slane %v1465, 4
        %v1467 = vadd.f32 %v1465, %v1466
        %v1468 = vrot.slane %v1467, 2
        %v1469 = vadd.f32 %v1467, %v1468
        %v1470 = vrot.slane %v1469, 1
        %v1471 = vadd.f32 %v1469, %v1470
        %v1472 = vrcp.pop 8.0
        %v1473 = vmul.f32 8.0, %v1472
        %v1474 = vsub.f32 1.0, %v1473
        %v1475 = vmul.f32 %v1472, %v1474
        %v1476 = vadd.f32 %v1472, %v1475
        %vm1477 = vweird.f32 %v1472
        %v1478 = vsel %vm1477, %v1472, %v1476
        %v1479 = vmul.f32 %v1471, %v1478
        %vm1480 = vcmask 253952
        %1481 = vst.msk [vmem:[%s746] sm:$0x1] %vm1480, %v1479
        %v1482 = vsel %vm785, %v754, 0.0
        %v1483 = vrot.slane %v1482, 4
        %v1484 = vadd.f32 %v1482, %v1483
        %v1485 = vrot.slane %v1484, 2
        %v1486 = vadd.f32 %v1484, %v1485
        %v1487 = vrot.slane %v1486, 1
        %v1488 = vadd.f32 %v1486, %v1487
        %v1489 = vmul.f32 %v1488, %v1478
        %1490 = vst.msk [vmem:[%s749] sm:$0x1] %vm1480, %v1489
        %p1491 = scmp.lt.s32.totalorder %s37, 1
        %s1492 = scalar_select %p1491, %s37, 1
        %s1493 = scalar_lea.vmem %s17, %s1492
        %p1494 = scmp.lt.s32.totalorder %s37, 1
        %s1495 = scalar_select %p1494, %s37, 1
        %s1496 = scalar_lea.vmem %s18, %s1495
        // Predicated region
        $region121: #{adversarial_net_forward.1} parent=87 // pred_check
          %p1497 = pneg %p427
        $region122: #{adversarial_net_forward.1} parent=87 // pred_check_branch
          %1499 = sbr.rel (%p1497) target = $region124
        $region123: #{adversarial_net_forward.1} parent=87 // pred_region
          _
        $region124: #{adversarial_net_forward.1} parent=87 // pred_fallthru
          _
        // Predicated region
        $region125: #{adversarial_net_forward.1} parent=87 // pred_check
          %p1500 = pneg %p453
        $region126: #{adversarial_net_forward.1} parent=87 // pred_check_branch
          %1502 = sbr.rel (%p1500) target = $region128
        $region127: #{adversarial_net_forward.1} parent=87 // pred_region
          _
        $region128: #{adversarial_net_forward.1} parent=87 // pred_fallthru
          _
      $region88: #{adversarial_net_forward.1} parent=5 // pred_fallthru
        _
      %p1503 = scmp.le.s32.totalorder 2, %s32
      // Predicated region
      $region129: #{adversarial_net_forward.1} parent=5 // pred_check
        %p1504 = pneg %p1503
      $region130: #{adversarial_net_forward.1} parent=5 // pred_check_branch
        %1506 = sbr.rel (%p1504) target = $region132
      $region131: #{adversarial_net_forward.1} parent=5 // pred_region
        %s1507 = ssub.s32 %s32, 2
        // Predicated region
        $region133: #{adversarial_net_forward.1} parent=131 // pred_check
          %p1508 = pneg %p433
        $region134: #{adversarial_net_forward.1} parent=131 // pred_check_branch
          %1510 = sbr.rel (%p1508) target = $region136
        $region135: #{adversarial_net_forward.1} parent=131 // pred_region
          %p1511 = scmp.lt.s32.totalorder %s38, 1
          %s1512 = scalar_select %p1511, %s38, 1
          %s1513 = scalar_lea.vmem %s17, %s1512
        $region136: #{adversarial_net_forward.1} parent=131 // pred_fallthru
          _
        // Predicated region
        $region137: #{adversarial_net_forward.1} parent=131 // pred_check
          %p1514 = pneg %p459
        $region138: #{adversarial_net_forward.1} parent=131 // pred_check_branch
          %1516 = sbr.rel (%p1514) target = $region140
        $region139: #{adversarial_net_forward.1} parent=131 // pred_region
          %p1517 = scmp.lt.s32.totalorder %s38, 1
          %s1518 = scalar_select %p1517, %s38, 1
          %s1519 = scalar_lea.vmem %s18, %s1518
        $region140: #{adversarial_net_forward.1} parent=131 // pred_fallthru
          _
      $region132: #{adversarial_net_forward.1} parent=5 // pred_fallthru
        _
    $region6: #{adversarial_net_forward.1} parent=1 // loop_footer
      %s36 = sadd.s32 1, %s32
    $region7: #{adversarial_net_forward.1} parent=1 // loop_footer_branch
      %31 = sbr.rel target = $region3
    $region8: #{adversarial_net_forward.1} parent=1 // loop_exit
      _
    %1520 = vsyncpa [#allocation3], 1
    %s1521 = scalar_lea.sflag [#allocation3], 1
    %1522 = vsyncpa %s1521, 1
    %1523 = vsyncpa [#allocation5], 1
    %1524 = vsyncpa [#allocation8], 1
    %1525 = vsyncpa [#allocation11], 1
    %1526 = vsyncpa [#allocation14], 1

</llo_original>
